<compile_context>
chip_gen: v7x
topology: tpu7x:2x2x1
jax: 0.10.0
libtpu: 0.0.40
codegen_flags: <defaults>
</compile_context>

<pallas_src>
import functools

import jax
import jax.numpy as jnp
from jax.experimental import pallas as pl
from jax.experimental.pallas import tpu as pltpu

LN_EPS = 1e-5   # torch.nn.LayerNorm default eps
LANE = 128      # TPU lane width


def _round_up(x, m):
    return (x + m - 1) // m * m


def _layernorm_padded(h, gamma, beta, width):
    """LayerNorm over the first `width` lanes of a (tile_b, 128) block whose lanes
    >= width are exactly 0.  gamma/beta are zero-padded there, so the output lanes
    >= width stay exactly 0 as well."""
    inv_w = 1.0 / float(width)
    mean = jnp.sum(h, axis=-1, keepdims=True) * inv_w
    var = jnp.sum(h * h, axis=-1, keepdims=True) * inv_w - mean * mean
    return (h - mean) * jax.lax.rsqrt(var + LN_EPS) * gamma + beta


def _mlp_kernel(x_ref, w_ref, v_ref, o_ref, *,
                din, h0, h1, h2, w1_row, w2_row, apply_sigmoid):
    # --- unpack lane-dense parameter blocks (static, tile-aligned slices) ---
    w0 = w_ref[pl.ds(0, din), :]         # (din, 128) bf16; cols >= h0 are 0
    w1 = w_ref[pl.ds(w1_row, LANE), :]   # (128, 128) bf16; real block is (h0, h1)
    w2 = w_ref[pl.ds(w2_row, LANE), :]   # (128, 128) bf16; real block is (h1, h2)
    b0 = v_ref[pl.ds(0, 1), :]
    g0 = v_ref[pl.ds(1, 1), :]
    be0 = v_ref[pl.ds(2, 1), :]
    b1 = v_ref[pl.ds(3, 1), :]
    g1 = v_ref[pl.ds(4, 1), :]
    be1 = v_ref[pl.ds(5, 1), :]
    b2 = v_ref[pl.ds(6, 1), :]

    x = x_ref[...].astype(jnp.bfloat16)   # no-op if the caller already feeds bf16

    # Linear0 -> LayerNorm(h0) -> ReLU -> Dropout (eval-mode identity)
    h = jnp.dot(x, w0, preferred_element_type=jnp.float32) + b0       # (tile_b, 128)
    h = _layernorm_padded(h, g0, be0, h0)
    h = jnp.maximum(h, 0.0)
    # TODO(synk): nn.Dropout(p=0.5) is stochastic in training mode; modeled as eval-mode identity.

    # Linear1 -> LayerNorm(h1) -> ReLU -> Dropout (eval-mode identity)
    h = jnp.dot(h.astype(jnp.bfloat16), w1, preferred_element_type=jnp.float32) + b1
    h = _layernorm_padded(h, g1, be1, h1)
    h = jnp.maximum(h, 0.0)

    # Linear2 -> Sigmoid; epilogue confined to the h2 real columns, (tile_b, h2) store.
    h = jnp.dot(h.astype(jnp.bfloat16), w2, preferred_element_type=jnp.float32) + b2
    out = h[:, :h2]
    if apply_sigmoid:
        out = jax.nn.sigmoid(out)
    o_ref[...] = out.astype(o_ref.dtype)


def _pack_params(params, din, h0, h1, h2):
    """Pack all 10 parameter arrays into one lane-dense bf16 weight slab and one f32
    bias/LayerNorm slab.  Every block is zero-padded out to 128 lanes so all in-kernel
    slices are full-lane, and zero-padded gamma/beta keep padded activation lanes 0."""
    assert max(h0, h1, h2) <= LANE
    w1_row = _round_up(din, 16)            # bf16 sublane-tile aligned row offsets
    w2_row = w1_row + LANE
    n_rows = w2_row + LANE                 # multiple of 16

    wpack = jnp.zeros((n_rows, LANE), jnp.bfloat16)
    wpack = wpack.at[0:din, 0:h0].set(params["w0"].astype(jnp.bfloat16))
    wpack = wpack.at[w1_row:w1_row + h0, 0:h1].set(params["w1"].astype(jnp.bfloat16))
    wpack = wpack.at[w2_row:w2_row + h1, 0:h2].set(params["w2"].astype(jnp.bfloat16))

    vpack = jnp.zeros((8, LANE), jnp.float32)
    vpack = vpack.at[0, 0:h0].set(params["b0"].reshape(-1))
    vpack = vpack.at[1, 0:h0].set(params["g0"].reshape(-1))
    vpack = vpack.at[2, 0:h0].set(params["be0"].reshape(-1))
    vpack = vpack.at[3, 0:h1].set(params["b1"].reshape(-1))
    vpack = vpack.at[4, 0:h1].set(params["g1"].reshape(-1))
    vpack = vpack.at[5, 0:h1].set(params["be1"].reshape(-1))
    vpack = vpack.at[6, 0:h2].set(params["b2"].reshape(-1))
    return wpack, vpack, w1_row, w2_row


def fully_connected_layer(x, params, *, apply_sigmoid=True, tile_b=1024,
                          core_parallel="auto"):
    """x: (B, input_size) f32 (or bf16). params: dict of pre-transposed (in,out) weights."""
    B, din = x.shape
    h0 = params["w0"].shape[1]
    h1 = params["w1"].shape[1]
    h2 = params["w2"].shape[1]

    wpack, vpack, w1_row, w2_row = _pack_params(params, din, h0, h1, h2)

    # Batch tiling: big tiles amortize the ~0.35us/step overhead; no divisibility
    # requirement and no jnp.pad of x — the last (partial) block is handled by Pallas.
    tile_b = min(int(tile_b), _round_up(B, 8))
    tile_b = max(8, _round_up(tile_b, 8))
    grid = pl.cdiv(B, tile_b)

    kernel = functools.partial(
        _mlp_kernel, din=din, h0=h0, h1=h1, h2=h2,
        w1_row=w1_row, w2_row=w2_row, apply_sigmoid=apply_sigmoid)

    cost = pl.CostEstimate(
        flops=2 * B * (din * h0 + h0 * h1 + h1 * h2),
        transcendentals=B * ((h2 + 2) if apply_sigmoid else 2),
        bytes_accessed=(B * din * x.dtype.itemsize + B * h2 * 4
                        + wpack.size * wpack.dtype.itemsize
                        + vpack.size * vpack.dtype.itemsize),
    )

    def call(dim_sem):
        return pl.pallas_call(
            kernel,
            out_shape=jax.ShapeDtypeStruct((B, h2), jnp.float32),
            grid_spec=pltpu.PrefetchScalarGridSpec(
                num_scalar_prefetch=0,
                grid=(grid,),
                in_specs=[
                    pl.BlockSpec((tile_b, din), lambda i: (i, 0)),
                    pl.BlockSpec(wpack.shape, lambda i: (0, 0)),   # resident constants
                    pl.BlockSpec(vpack.shape, lambda i: (0, 0)),   # resident constants
                ],
                out_specs=pl.BlockSpec((tile_b, h2), lambda i: (i, 0)),
            ),
            compiler_params=pltpu.CompilerParams(dimension_semantics=dim_sem),
            cost_estimate=cost,
        )(x, wpack, vpack)

    # v7x: split the batch grid across the 2 TensorCores.  On single-TC chips or
    # runtimes that reject CORE_PARALLEL we transparently fall back to PARALLEL.
    want_cp = (core_parallel is True) or (core_parallel == "auto" and grid >= 2)
    if want_cp and hasattr(pltpu, "CORE_PARALLEL"):
        try:
            # Block here so any compile/runtime rejection surfaces and we can fall back.
            return jax.block_until_ready(call((pltpu.CORE_PARALLEL,)))
        except Exception:
            pass
    return call((pltpu.PARALLEL,))


def init_params(key, input_size, hidden_size):
    """Xavier-normal weights (gain=1), zero biases, default LayerNorm params (all f32)."""
    def xavier_normal(k, fan_in, fan_out):
        std = (2.0 / (fan_in + fan_out)) ** 0.5
        # stored as (in, out) == transposed PyTorch (out, in) weight
        return std * jax.random.normal(k, (fan_in, fan_out), dtype=jnp.float32)

    h0, h1, h2 = hidden_size
    k0, k1, k2 = jax.random.split(key, 3)
    return {
        "w0": xavier_normal(k0, input_size, h0),
        "b0": jnp.zeros((1, h0), jnp.float32),
        "g0": jnp.ones((1, h0), jnp.float32),    # LayerNorm(h0) weight
        "be0": jnp.zeros((1, h0), jnp.float32),  # LayerNorm(h0) bias
        "w1": xavier_normal(k1, h0, h1),
        "b1": jnp.zeros((1, h1), jnp.float32),
        "g1": jnp.ones((1, h1), jnp.float32),    # LayerNorm(h1) weight
        "be1": jnp.zeros((1, h1), jnp.float32),  # LayerNorm(h1) bias
        "w2": xavier_normal(k2, h1, h2),
        "b2": jnp.zeros((1, h2), jnp.float32),
    }


def _layernorm_ref(h, gamma, beta):
    mean = jnp.mean(h, axis=-1, keepdims=True)
    var = jnp.mean(jnp.square(h - mean), axis=-1, keepdims=True)
    return (h - mean) * jax.lax.rsqrt(var + LN_EPS) * gamma + beta


def reference_forward(x, params, *, apply_sigmoid=True):
    """Pure-JAX f32 reference mirroring the PyTorch module (eval mode)."""
    h = x @ params["w0"] + params["b0"]
    h = _layernorm_ref(h, params["g0"], params["be0"])
    h = jnp.maximum(h, 0.0)
    h = h @ params["w1"] + params["b1"]
    h = _layernorm_ref(h, params["g1"], params["be1"])
    h = jnp.maximum(h, 0.0)
    h = h @ params["w2"] + params["b2"]
    return jax.nn.sigmoid(h) if apply_sigmoid else h


if __name__ == "__main__":
    key = jax.random.PRNGKey(0)
    kx, kp = jax.random.split(key)

    input_size = 32
    hidden_size = [64, 32, 16]
    batch = 200  # intentionally NOT a multiple of tile_b: exercises cdiv + partial tail block

    x = jax.random.normal(kx, (batch, input_size), dtype=jnp.float32)
    params = init_params(kp, input_size, hidden_size)

    # tile_b=128 -> 2 grid steps on this small demo batch (lets CORE_PARALLEL engage
    # both v7x TensorCores); for production batches keep the default tile_b=1024.
    out = fully_connected_layer(x, params, apply_sigmoid=True, tile_b=128)
    out = jax.block_until_ready(out)

    ref = reference_forward(x, params, apply_sigmoid=True)
    assert out.shape == (batch, hidden_size[-1])
    # Tolerance loosened vs the pure-f32 reference because the matmuls use bf16 operands.
    assert jnp.allclose(out, ref, atol=2e-2, rtol=2e-2), float(jnp.max(jnp.abs(out - ref)))

    print("KERNEL_OK")
</pallas_src>

<mosaic_0001>
module attributes {stable_mosaic.version = 11 : i64} {
  func.func @_mlp_kernel(%arg0: i32, %arg1: memref<128x32xf32, #tpu.memory_space<vmem>>, %arg2: memref<288x128xbf16, #tpu.memory_space<vmem>>, %arg3: memref<8x128xf32, #tpu.memory_space<vmem>>, %arg4: memref<128x16xf32, #tpu.memory_space<vmem>>) attributes {dimension_semantics = [#tpu.dimension_semantics<core_parallel>], iteration_bounds = array<i64: 2>, scalar_prefetch = 0 : i64, scratch_operands = 0 : i64, tpu.core_type = #tpu.core_type<tc>, window_params = [{transform_indices = @transform_0, window_bounds = array<i64: 128, 32>}, {pipeline_mode = #tpu.pipeline_mode<synchronous>, transform_indices = @transform_1, window_bounds = array<i64: 288, 128>}, {pipeline_mode = #tpu.pipeline_mode<synchronous>, transform_indices = @transform_2, window_bounds = array<i64: 8, 128>}, {transform_indices = @transform_3, window_bounds = array<i64: 128, 16>}]} {
    %c0 = arith.constant 0 : index
    %c0_0 = arith.constant 0 : index
    %0 = vector.load %arg2[%c0, %c0_0] : memref<288x128xbf16, #tpu.memory_space<vmem>>, vector<32x128xbf16>
    %c32 = arith.constant 32 : index
    %c0_1 = arith.constant 0 : index
    %1 = vector.load %arg2[%c32, %c0_1] : memref<288x128xbf16, #tpu.memory_space<vmem>>, vector<128x128xbf16>
    %c160 = arith.constant 160 : index
    %c0_2 = arith.constant 0 : index
    %2 = vector.load %arg2[%c160, %c0_2] : memref<288x128xbf16, #tpu.memory_space<vmem>>, vector<128x128xbf16>
    %c0_3 = arith.constant 0 : index
    %c0_4 = arith.constant 0 : index
    %3 = vector.load %arg3[%c0_3, %c0_4] : memref<8x128xf32, #tpu.memory_space<vmem>>, vector<1x128xf32>
    %c1 = arith.constant 1 : index
    %c0_5 = arith.constant 0 : index
    %4 = vector.load %arg3[%c1, %c0_5] : memref<8x128xf32, #tpu.memory_space<vmem>>, vector<1x128xf32>
    %c2 = arith.constant 2 : index
    %c0_6 = arith.constant 0 : index
    %5 = vector.load %arg3[%c2, %c0_6] : memref<8x128xf32, #tpu.memory_space<vmem>>, vector<1x128xf32>
    %c3 = arith.constant 3 : index
    %c0_7 = arith.constant 0 : index
    %6 = vector.load %arg3[%c3, %c0_7] : memref<8x128xf32, #tpu.memory_space<vmem>>, vector<1x128xf32>
    %c4 = arith.constant 4 : index
    %c0_8 = arith.constant 0 : index
    %7 = vector.load %arg3[%c4, %c0_8] : memref<8x128xf32, #tpu.memory_space<vmem>>, vector<1x128xf32>
    %c5 = arith.constant 5 : index
    %c0_9 = arith.constant 0 : index
    %8 = vector.load %arg3[%c5, %c0_9] : memref<8x128xf32, #tpu.memory_space<vmem>>, vector<1x128xf32>
    %c6 = arith.constant 6 : index
    %c0_10 = arith.constant 0 : index
    %9 = vector.load %arg3[%c6, %c0_10] : memref<8x128xf32, #tpu.memory_space<vmem>>, vector<1x128xf32>
    %c0_11 = arith.constant 0 : index
    %c0_12 = arith.constant 0 : index
    %10 = vector.load %arg1[%c0_11, %c0_12] : memref<128x32xf32, #tpu.memory_space<vmem>>, vector<128x32xf32>
    %11 = arith.truncf %10 : vector<128x32xf32> to vector<128x32xbf16>
    %cst = arith.constant dense<0.000000e+00> : vector<128x128xf32>
    %12 = tpu.matmul %11, %0, %cst {dimension_numbers = #tpu.dot_dimension_numbers<[1], [0], [0], [1], [0, 0, 1, 1], [], []>} : vector<128x32xbf16>, vector<32x128xbf16>, vector<128x128xf32> -> vector<128x128xf32>
    %13 = vector.broadcast %3 : vector<1x128xf32> to vector<128x128xf32>
    %14 = arith.addf %12, %13 : vector<128x128xf32>
    %cst_13 = arith.constant dense<0.000000e+00> : vector<128xf32>
    %15 = vector.multi_reduction <add>, %14, %cst_13 [1] : vector<128x128xf32> to vector<128xf32>
    %16 = vector.shape_cast %15 : vector<128xf32> to vector<128x1xf32>
    %cst_14 = arith.constant 1.562500e-02 : f32
    %17 = vector.broadcast %cst_14 : f32 to vector<128x1xf32>
    %18 = arith.mulf %16, %17 : vector<128x1xf32>
    %19 = arith.mulf %14, %14 : vector<128x128xf32>
    %cst_15 = arith.constant dense<0.000000e+00> : vector<128xf32>
    %20 = vector.multi_reduction <add>, %19, %cst_15 [1] : vector<128x128xf32> to vector<128xf32>
    %21 = vector.shape_cast %20 : vector<128xf32> to vector<128x1xf32>
    %cst_16 = arith.constant 1.562500e-02 : f32
    %22 = vector.broadcast %cst_16 : f32 to vector<128x1xf32>
    %23 = arith.mulf %21, %22 : vector<128x1xf32>
    %24 = arith.mulf %18, %18 : vector<128x1xf32>
    %25 = arith.subf %23, %24 : vector<128x1xf32>
    %26 = vector.broadcast %18 : vector<128x1xf32> to vector<128x128xf32>
    %27 = arith.subf %14, %26 : vector<128x128xf32>
    %cst_17 = arith.constant 9.99999974E-6 : f32
    %28 = vector.broadcast %cst_17 : f32 to vector<128x1xf32>
    %29 = arith.addf %25, %28 : vector<128x1xf32>
    %30 = math.rsqrt %29 : vector<128x1xf32>
    %31 = vector.broadcast %30 : vector<128x1xf32> to vector<128x128xf32>
    %32 = arith.mulf %27, %31 : vector<128x128xf32>
    %33 = vector.broadcast %4 : vector<1x128xf32> to vector<128x128xf32>
    %34 = arith.mulf %32, %33 : vector<128x128xf32>
    %35 = vector.broadcast %5 : vector<1x128xf32> to vector<128x128xf32>
    %36 = arith.addf %34, %35 : vector<128x128xf32>
    %cst_18 = arith.constant 0.000000e+00 : f32
    %37 = vector.broadcast %cst_18 : f32 to vector<128x128xf32>
    %38 = arith.maximumf %36, %37 : vector<128x128xf32>
    %39 = arith.truncf %38 : vector<128x128xf32> to vector<128x128xbf16>
    %cst_19 = arith.constant dense<0.000000e+00> : vector<128x128xf32>
    %40 = tpu.matmul %39, %1, %cst_19 {dimension_numbers = #tpu.dot_dimension_numbers<[1], [0], [0], [1], [0, 0, 1, 1], [], []>} : vector<128x128xbf16>, vector<128x128xbf16>, vector<128x128xf32> -> vector<128x128xf32>
    %41 = vector.broadcast %6 : vector<1x128xf32> to vector<128x128xf32>
    %42 = arith.addf %40, %41 : vector<128x128xf32>
    %cst_20 = arith.constant dense<0.000000e+00> : vector<128xf32>
    %43 = vector.multi_reduction <add>, %42, %cst_20 [1] : vector<128x128xf32> to vector<128xf32>
    %44 = vector.shape_cast %43 : vector<128xf32> to vector<128x1xf32>
    %cst_21 = arith.constant 3.125000e-02 : f32
    %45 = vector.broadcast %cst_21 : f32 to vector<128x1xf32>
    %46 = arith.mulf %44, %45 : vector<128x1xf32>
    %47 = arith.mulf %42, %42 : vector<128x128xf32>
    %cst_22 = arith.constant dense<0.000000e+00> : vector<128xf32>
    %48 = vector.multi_reduction <add>, %47, %cst_22 [1] : vector<128x128xf32> to vector<128xf32>
    %49 = vector.shape_cast %48 : vector<128xf32> to vector<128x1xf32>
    %cst_23 = arith.constant 3.125000e-02 : f32
    %50 = vector.broadcast %cst_23 : f32 to vector<128x1xf32>
    %51 = arith.mulf %49, %50 : vector<128x1xf32>
    %52 = arith.mulf %46, %46 : vector<128x1xf32>
    %53 = arith.subf %51, %52 : vector<128x1xf32>
    %54 = vector.broadcast %46 : vector<128x1xf32> to vector<128x128xf32>
    %55 = arith.subf %42, %54 : vector<128x128xf32>
    %cst_24 = arith.constant 9.99999974E-6 : f32
    %56 = vector.broadcast %cst_24 : f32 to vector<128x1xf32>
    %57 = arith.addf %53, %56 : vector<128x1xf32>
    %58 = math.rsqrt %57 : vector<128x1xf32>
    %59 = vector.broadcast %58 : vector<128x1xf32> to vector<128x128xf32>
    %60 = arith.mulf %55, %59 : vector<128x128xf32>
    %61 = vector.broadcast %7 : vector<1x128xf32> to vector<128x128xf32>
    %62 = arith.mulf %60, %61 : vector<128x128xf32>
    %63 = vector.broadcast %8 : vector<1x128xf32> to vector<128x128xf32>
    %64 = arith.addf %62, %63 : vector<128x128xf32>
    %cst_25 = arith.constant 0.000000e+00 : f32
    %65 = vector.broadcast %cst_25 : f32 to vector<128x128xf32>
    %66 = arith.maximumf %64, %65 : vector<128x128xf32>
    %67 = arith.truncf %66 : vector<128x128xf32> to vector<128x128xbf16>
    %cst_26 = arith.constant dense<0.000000e+00> : vector<128x128xf32>
    %68 = tpu.matmul %67, %2, %cst_26 {dimension_numbers = #tpu.dot_dimension_numbers<[1], [0], [0], [1], [0, 0, 1, 1], [], []>} : vector<128x128xbf16>, vector<128x128xbf16>, vector<128x128xf32> -> vector<128x128xf32>
    %69 = vector.broadcast %9 : vector<1x128xf32> to vector<128x128xf32>
    %70 = arith.addf %68, %69 : vector<128x128xf32>
    %71 = vector.extract_strided_slice %70 {offsets = [0, 0], sizes = [128, 16], strides = [1, 1]} : vector<128x128xf32> to vector<128x16xf32>
    %72 = arith.negf %71 : vector<128x16xf32>
    %73 = math.exp %72 : vector<128x16xf32>
    %cst_27 = arith.constant 1.000000e+00 : f32
    %74 = vector.broadcast %cst_27 : f32 to vector<128x16xf32>
    %75 = arith.addf %74, %73 : vector<128x16xf32>
    %76 = arith.divf %74, %75 : vector<128x16xf32>
    %c0_28 = arith.constant 0 : index
    %c0_29 = arith.constant 0 : index
    %77 = vector.load %arg4[%c0_28, %c0_29] : memref<128x16xf32, #tpu.memory_space<vmem>>, vector<128x16xf32>
    tpu.vector_store %arg4[%c0_28, %c0_29], %76 {strides = array<i32>} : memref<128x16xf32, #tpu.memory_space<vmem>>, vector<128x16xf32>,
    return
  }
  func.func @transform_0(%arg0: i32) -> (i32, i32) {
    %c0_i32 = arith.constant 0 : i32
    %c0_i32_0 = arith.constant 0 : i32
    return %arg0, %c0_i32 : i32, i32
  }
  func.func @transform_1(%arg0: i32) -> (i32, i32) {
    %c0_i32 = arith.constant 0 : i32
    %c0_i32_0 = arith.constant 0 : i32
    %c0_i32_1 = arith.constant 0 : i32
    return %c0_i32, %c0_i32_0 : i32, i32
  }
  func.func @transform_2(%arg0: i32) -> (i32, i32) {
    %c0_i32 = arith.constant 0 : i32
    %c0_i32_0 = arith.constant 0 : i32
    %c0_i32_1 = arith.constant 0 : i32
    return %c0_i32, %c0_i32_0 : i32, i32
  }
  func.func @transform_3(%arg0: i32) -> (i32, i32) {
    %c0_i32 = arith.constant 0 : i32
    %c0_i32_0 = arith.constant 0 : i32
    return %arg0, %c0_i32 : i32, i32
  }
}

module attributes {stable_mosaic.version = 11 : i64} {
  func.func @_mlp_kernel(%arg0: i32, %arg1: memref<128x32xf32, #tpu.memory_space<vmem>>, %arg2: memref<288x128xbf16, #tpu.memory_space<vmem>>, %arg3: memref<8x128xf32, #tpu.memory_space<vmem>>, %arg4: memref<128x16xf32, #tpu.memory_space<vmem>>) attributes {dimension_semantics = [#tpu.dimension_semantics<parallel>], iteration_bounds = array<i64: 2>, scalar_prefetch = 0 : i64, scratch_operands = 0 : i64, tpu.core_type = #tpu.core_type<tc>, window_params = [{transform_indices = @transform_0, window_bounds = array<i64: 128, 32>}, {pipeline_mode = #tpu.pipeline_mode<synchronous>, transform_indices = @transform_1, window_bounds = array<i64: 288, 128>}, {pipeline_mode = #tpu.pipeline_mode<synchronous>, transform_indices = @transform_2, window_bounds = array<i64: 8, 128>}, {transform_indices = @transform_3, window_bounds = array<i64: 128, 16>}]} {
    %c0 = arith.constant 0 : index
    %c0_0 = arith.constant 0 : index
    %0 = vector.load %arg2[%c0, %c0_0] : memref<288x128xbf16, #tpu.memory_space<vmem>>, vector<32x128xbf16>
    %c32 = arith.constant 32 : index
    %c0_1 = arith.constant 0 : index
    %1 = vector.load %arg2[%c32, %c0_1] : memref<288x128xbf16, #tpu.memory_space<vmem>>, vector<128x128xbf16>
    %c160 = arith.constant 160 : index
    %c0_2 = arith.constant 0 : index
    %2 = vector.load %arg2[%c160, %c0_2] : memref<288x128xbf16, #tpu.memory_space<vmem>>, vector<128x128xbf16>
    %c0_3 = arith.constant 0 : index
    %c0_4 = arith.constant 0 : index
    %3 = vector.load %arg3[%c0_3, %c0_4] : memref<8x128xf32, #tpu.memory_space<vmem>>, vector<1x128xf32>
    %c1 = arith.constant 1 : index
    %c0_5 = arith.constant 0 : index
    %4 = vector.load %arg3[%c1, %c0_5] : memref<8x128xf32, #tpu.memory_space<vmem>>, vector<1x128xf32>
    %c2 = arith.constant 2 : index
    %c0_6 = arith.constant 0 : index
    %5 = vector.load %arg3[%c2, %c0_6] : memref<8x128xf32, #tpu.memory_space<vmem>>, vector<1x128xf32>
    %c3 = arith.constant 3 : index
    %c0_7 = arith.constant 0 : index
    %6 = vector.load %arg3[%c3, %c0_7] : memref<8x128xf32, #tpu.memory_space<vmem>>, vector<1x128xf32>
    %c4 = arith.constant 4 : index
    %c0_8 = arith.constant 0 : index
    %7 = vector.load %arg3[%c4, %c0_8] : memref<8x128xf32, #tpu.memory_space<vmem>>, vector<1x128xf32>
    %c5 = arith.constant 5 : index
    %c0_9 = arith.constant 0 : index
    %8 = vector.load %arg3[%c5, %c0_9] : memref<8x128xf32, #tpu.memory_space<vmem>>, vector<1x128xf32>
    %c6 = arith.constant 6 : index
    %c0_10 = arith.constant 0 : index
    %9 = vector.load %arg3[%c6, %c0_10] : memref<8x128xf32, #tpu.memory_space<vmem>>, vector<1x128xf32>
    %c0_11 = arith.constant 0 : index
    %c0_12 = arith.constant 0 : index
    %10 = vector.load %arg1[%c0_11, %c0_12] : memref<128x32xf32, #tpu.memory_space<vmem>>, vector<128x32xf32>
    %11 = arith.truncf %10 : vector<128x32xf32> to vector<128x32xbf16>
    %cst = arith.constant dense<0.000000e+00> : vector<128x128xf32>
    %12 = tpu.matmul %11, %0, %cst {dimension_numbers = #tpu.dot_dimension_numbers<[1], [0], [0], [1], [0, 0, 1, 1], [], []>} : vector<128x32xbf16>, vector<32x128xbf16>, vector<128x128xf32> -> vector<128x128xf32>
    %13 = vector.broadcast %3 : vector<1x128xf32> to vector<128x128xf32>
    %14 = arith.addf %12, %13 : vector<128x128xf32>
    %cst_13 = arith.constant dense<0.000000e+00> : vector<128xf32>
    %15 = vector.multi_reduction <add>, %14, %cst_13 [1] : vector<128x128xf32> to vector<128xf32>
    %16 = vector.shape_cast %15 : vector<128xf32> to vector<128x1xf32>
    %cst_14 = arith.constant 1.562500e-02 : f32
    %17 = vector.broadcast %cst_14 : f32 to vector<128x1xf32>
    %18 = arith.mulf %16, %17 : vector<128x1xf32>
    %19 = arith.mulf %14, %14 : vector<128x128xf32>
    %cst_15 = arith.constant dense<0.000000e+00> : vector<128xf32>
    %20 = vector.multi_reduction <add>, %19, %cst_15 [1] : vector<128x128xf32> to vector<128xf32>
    %21 = vector.shape_cast %20 : vector<128xf32> to vector<128x1xf32>
    %cst_16 = arith.constant 1.562500e-02 : f32
    %22 = vector.broadcast %cst_16 : f32 to vector<128x1xf32>
    %23 = arith.mulf %21, %22 : vector<128x1xf32>
    %24 = arith.mulf %18, %18 : vector<128x1xf32>
    %25 = arith.subf %23, %24 : vector<128x1xf32>
    %26 = vector.broadcast %18 : vector<128x1xf32> to vector<128x128xf32>
    %27 = arith.subf %14, %26 : vector<128x128xf32>
    %cst_17 = arith.constant 9.99999974E-6 : f32
    %28 = vector.broadcast %cst_17 : f32 to vector<128x1xf32>
    %29 = arith.addf %25, %28 : vector<128x1xf32>
    %30 = math.rsqrt %29 : vector<128x1xf32>
    %31 = vector.broadcast %30 : vector<128x1xf32> to vector<128x128xf32>
    %32 = arith.mulf %27, %31 : vector<128x128xf32>
    %33 = vector.broadcast %4 : vector<1x128xf32> to vector<128x128xf32>
    %34 = arith.mulf %32, %33 : vector<128x128xf32>
    %35 = vector.broadcast %5 : vector<1x128xf32> to vector<128x128xf32>
    %36 = arith.addf %34, %35 : vector<128x128xf32>
    %cst_18 = arith.constant 0.000000e+00 : f32
    %37 = vector.broadcast %cst_18 : f32 to vector<128x128xf32>
    %38 = arith.maximumf %36, %37 : vector<128x128xf32>
    %39 = arith.truncf %38 : vector<128x128xf32> to vector<128x128xbf16>
    %cst_19 = arith.constant dense<0.000000e+00> : vector<128x128xf32>
    %40 = tpu.matmul %39, %1, %cst_19 {dimension_numbers = #tpu.dot_dimension_numbers<[1], [0], [0], [1], [0, 0, 1, 1], [], []>} : vector<128x128xbf16>, vector<128x128xbf16>, vector<128x128xf32> -> vector<128x128xf32>
    %41 = vector.broadcast %6 : vector<1x128xf32> to vector<128x128xf32>
    %42 = arith.addf %40, %41 : vector<128x128xf32>
    %cst_20 = arith.constant dense<0.000000e+00> : vector<128xf32>
    %43 = vector.multi_reduction <add>, %42, %cst_20 [1] : vector<128x128xf32> to vector<128xf32>
    %44 = vector.shape_cast %43 : vector<128xf32> to vector<128x1xf32>
    %cst_21 = arith.constant 3.125000e-02 : f32
    %45 = vector.broadcast %cst_21 : f32 to vector<128x1xf32>
    %46 = arith.mulf %44, %45 : vector<128x1xf32>
    %47 = arith.mulf %42, %42 : vector<128x128xf32>
    %cst_22 = arith.constant dense<0.000000e+00> : vector<128xf32>
    %48 = vector.multi_reduction <add>, %47, %cst_22 [1] : vector<128x128xf32> to vector<128xf32>
    %49 = vector.shape_cast %48 : vector<128xf32> to vector<128x1xf32>
    %cst_23 = arith.constant 3.125000e-02 : f32
    %50 = vector.broadcast %cst_23 : f32 to vector<128x1xf32>
    %51 = arith.mulf %49, %50 : vector<128x1xf32>
    %52 = arith.mulf %46, %46 : vector<128x1xf32>
    %53 = arith.subf %51, %52 : vector<128x1xf32>
    %54 = vector.broadcast %46 : vector<128x1xf32> to vector<128x128xf32>
    %55 = arith.subf %42, %54 : vector<128x128xf32>
    %cst_24 = arith.constant 9.99999974E-6 : f32
    %56 = vector.broadcast %cst_24 : f32 to vector<128x1xf32>
    %57 = arith.addf %53, %56 : vector<128x1xf32>
    %58 = math.rsqrt %57 : vector<128x1xf32>
    %59 = vector.broadcast %58 : vector<128x1xf32> to vector<128x128xf32>
    %60 = arith.mulf %55, %59 : vector<128x128xf32>
    %61 = vector.broadcast %7 : vector<1x128xf32> to vector<128x128xf32>
    %62 = arith.mulf %60, %61 : vector<128x128xf32>
    %63 = vector.broadcast %8 : vector<1x128xf32> to vector<128x128xf32>
    %64 = arith.addf %62, %63 : vector<128x128xf32>
    %cst_25 = arith.constant 0.000000e+00 : f32
    %65 = vector.broadcast %cst_25 : f32 to vector<128x128xf32>
    %66 = arith.maximumf %64, %65 : vector<128x128xf32>
    %67 = arith.truncf %66 : vector<128x128xf32> to vector<128x128xbf16>
    %cst_26 = arith.constant dense<0.000000e+00> : vector<128x128xf32>
    %68 = tpu.matmul %67, %2, %cst_26 {dimension_numbers = #tpu.dot_dimension_numbers<[1], [0], [0], [1], [0, 0, 1, 1], [], []>} : vector<128x128xbf16>, vector<128x128xbf16>, vector<128x128xf32> -> vector<128x128xf32>
    %69 = vector.broadcast %9 : vector<1x128xf32> to vector<128x128xf32>
    %70 = arith.addf %68, %69 : vector<128x128xf32>
    %71 = vector.extract_strided_slice %70 {offsets = [0, 0], sizes = [128, 16], strides = [1, 1]} : vector<128x128xf32> to vector<128x16xf32>
    %72 = arith.negf %71 : vector<128x16xf32>
    %73 = math.exp %72 : vector<128x16xf32>
    %cst_27 = arith.constant 1.000000e+00 : f32
    %74 = vector.broadcast %cst_27 : f32 to vector<128x16xf32>
    %75 = arith.addf %74, %73 : vector<128x16xf32>
    %76 = arith.divf %74, %75 : vector<128x16xf32>
    %c0_28 = arith.constant 0 : index
    %c0_29 = arith.constant 0 : index
    %77 = vector.load %arg4[%c0_28, %c0_29] : memref<128x16xf32, #tpu.memory_space<vmem>>, vector<128x16xf32>
    tpu.vector_store %arg4[%c0_28, %c0_29], %76 {strides = array<i32>} : memref<128x16xf32, #tpu.memory_space<vmem>>, vector<128x16xf32>,
    return
  }
  func.func @transform_0(%arg0: i32) -> (i32, i32) {
    %c0_i32 = arith.constant 0 : i32
    %c0_i32_0 = arith.constant 0 : i32
    return %arg0, %c0_i32 : i32, i32
  }
  func.func @transform_1(%arg0: i32) -> (i32, i32) {
    %c0_i32 = arith.constant 0 : i32
    %c0_i32_0 = arith.constant 0 : i32
    %c0_i32_1 = arith.constant 0 : i32
    return %c0_i32, %c0_i32_0 : i32, i32
  }
  func.func @transform_2(%arg0: i32) -> (i32, i32) {
    %c0_i32 = arith.constant 0 : i32
    %c0_i32_0 = arith.constant 0 : i32
    %c0_i32_1 = arith.constant 0 : i32
    return %c0_i32, %c0_i32_0 : i32, i32
  }
  func.func @transform_3(%arg0: i32) -> (i32, i32) {
    %c0_i32 = arith.constant 0 : i32
    %c0_i32_0 = arith.constant 0 : i32
    return %arg0, %c0_i32 : i32, i32
  }
}

</mosaic_0001>

<llo_original>
// kernel: tpu_custom_call.1
$region0: #{tpu_custom_call.1}
  #allocation0 [shape = 'u32[]', space=smem, size = 0x4, offset = 0x4, fixed_abs, tag = 'smem constant byte address 0x4 - core index']
  #allocation1 [shape = 'u32[144,128]{1,0:T(1,128)}', space=vmem, size = 0x12000, scoped, tag = 'internal scratch']
  %s0 = inlined_call_operand.vmem [shape: f32[200,32], index: 0, kind: input, shape index: {}]
  %s1 = inlined_call_operand.vmem [shape: bf16[288,128], index: 1, kind: input, shape index: {}]
  %s2 = inlined_call_operand.vmem [shape: f32[8,128], index: 2, kind: input, shape index: {}]
  %s3 = inlined_call_operand.vmem [shape: f32[200,16], index: 3, kind: output, shape index: {}]
  %s4 = sld [smem:[#allocation0]]
  $region93: #{tpu_custom_call.1} parent=0
    _
  %s6 = ssub.s32 1, %s4
  %s7 = scalar_select 0, %s6, %s4
  $region1: #{tpu_custom_call.1} parent=0
    #allocation2 [shape = 'u8[131072]{0}', space=vmem, size = 0x20000, scoped, tag = 'output window, operand 0']
    loop: start=0, step=1, limit=4
    $region2: #{tpu_custom_call.1} parent=1 // loop_pre_header
      _
    $region3: #{tpu_custom_call.1} parent=1 // loop_header
      %s9 = sphi 0, %s13
      %p10 = scmp.ge.s32.totalorder %s9, 4
      %s19 = sphi 0, %s21
      %s22 = sphi 0, %s19
      %s23 = sphi 0, %s22
      %s39 = sphi 0, %s23
      %s43 = sphi 0, %s43
      %s45 = sphi 0, %s43
      %s46 = sphi 0, %s45
      %s60 = sphi 0, %s46
      %s64 = sphi 0, %s64
      %s66 = sphi 0, %s64
      %s67 = sphi 0, %s66
      %s81 = sphi 0, %s67
      %s87 = sphi 0, %s89
      %s90 = sphi 0, %s87
      %s91 = sphi 0, %s90
      %s107 = sphi 0, %s91
    $region4: #{tpu_custom_call.1} parent=1 // loop_header_branch
      %12 = sbr.rel (%p10) target = $region8
    $region5: #{tpu_custom_call.1} parent=1 // loop_body
      %s14 = ssub.s32 %s9, 1
      %s15 = ssub.s32 %s9, 2
      %s16 = sadd.s32 %s9, 1
      %s17 = ssub.s32 %s9, %s16
      %p18 = scmp.eq.s32.totalorder %s17, 0
      %s20 = sadd.s32 %s19, 1
      %s21 = scalar_select %p18, %s19, %s20
      %p24 = pneg %p18
      %p25 = scmp.eq.s32.totalorder %s9, 1
      %p26 = por %p24, %p25
      %p27 = scmp.ne.s32.totalorder %s19, %s22
      %p28 = scmp.eq.s32.totalorder %s9, 0
      %p29 = por %p27, %p28
      %p30 = scmp.ne.s32.totalorder %s19, %s22
      %p31 = scmp.eq.s32.totalorder %s14, 1
      %p32 = por %p30, %p31
      %p33 = scmp.ne.s32.totalorder %s22, %s23
      %p34 = scmp.eq.s32.totalorder %s14, 0
      %p35 = por %p33, %p34
      %p36 = scmp.ne.s32.totalorder %s22, %s23
      %p37 = scmp.eq.s32.totalorder %s15, 1
      %p38 = por %p36, %p37
      %p40 = scmp.ne.s32.totalorder %s23, %s39
      %p41 = scmp.eq.s32.totalorder %s15, 0
      %p42 = por %p40, %p41
      %s44 = sadd.s32 %s43, 1
      %p47 = scmp.eq.s32.totalorder %s9, 1
      %p48 = scmp.ne.s32.totalorder %s43, %s45
      %p49 = scmp.eq.s32.totalorder %s9, 0
      %p50 = por %p48, %p49
      %p51 = scmp.ne.s32.totalorder %s43, %s45
      %p52 = scmp.eq.s32.totalorder %s14, 1
      %p53 = por %p51, %p52
      %p54 = scmp.ne.s32.totalorder %s45, %s46
      %p55 = scmp.eq.s32.totalorder %s14, 0
      %p56 = por %p54, %p55
      %p57 = scmp.ne.s32.totalorder %s45, %s46
      %p58 = scmp.eq.s32.totalorder %s15, 1
      %p59 = por %p57, %p58
      %p61 = scmp.ne.s32.totalorder %s46, %s60
      %p62 = scmp.eq.s32.totalorder %s15, 0
      %p63 = por %p61, %p62
      %s65 = sadd.s32 %s64, 1
      %p68 = scmp.eq.s32.totalorder %s9, 1
      %p69 = scmp.ne.s32.totalorder %s64, %s66
      %p70 = scmp.eq.s32.totalorder %s9, 0
      %p71 = por %p69, %p70
      %p72 = scmp.ne.s32.totalorder %s64, %s66
      %p73 = scmp.eq.s32.totalorder %s14, 1
      %p74 = por %p72, %p73
      %p75 = scmp.ne.s32.totalorder %s66, %s67
      %p76 = scmp.eq.s32.totalorder %s14, 0
      %p77 = por %p75, %p76
      %p78 = scmp.ne.s32.totalorder %s66, %s67
      %p79 = scmp.eq.s32.totalorder %s15, 1
      %p80 = por %p78, %p79
      %p82 = scmp.ne.s32.totalorder %s67, %s81
      %p83 = scmp.eq.s32.totalorder %s15, 0
      %p84 = por %p82, %p83
      %s85 = ssub.s32 %s9, %s16
      %p86 = scmp.eq.s32.totalorder %s85, 0
      %s88 = sadd.s32 %s87, 1
      %s89 = scalar_select %p86, %s87, %s88
      %p92 = pneg %p86
      %p93 = scmp.eq.s32.totalorder %s9, 1
      %p94 = por %p92, %p93
      %p95 = scmp.ne.s32.totalorder %s87, %s90
      %p96 = scmp.eq.s32.totalorder %s9, 0
      %p97 = por %p95, %p96
      %p98 = scmp.ne.s32.totalorder %s87, %s90
      %p99 = scmp.eq.s32.totalorder %s14, 1
      %p100 = por %p98, %p99
      %p101 = scmp.ne.s32.totalorder %s90, %s91
      %p102 = scmp.eq.s32.totalorder %s14, 0
      %p103 = por %p101, %p102
      %p104 = scmp.ne.s32.totalorder %s90, %s91
      %p105 = scmp.eq.s32.totalorder %s15, 1
      %p106 = por %p104, %p105
      %p108 = scmp.ne.s32.totalorder %s91, %s107
      %p109 = scmp.eq.s32.totalorder %s15, 0
      %p110 = por %p108, %p109
      %p111 = scmp.le.s32.totalorder 1, %s9
      %p112 = scmp.lt.s32.totalorder %s9, 3
      %p113 = pnand %p111, %p112
      %p114 = pneg %p113
      // Predicated region
      $region9: #{tpu_custom_call.1} parent=5 // pred_check
        _
      $region10: #{tpu_custom_call.1} parent=5 // pred_check_branch
        %116 = sbr.rel (%p113) target = $region12
      $region11: #{tpu_custom_call.1} parent=5 // pred_region
        %s117 = ssub.s32 %s9, 1
        // Predicated region
        $region13: #{tpu_custom_call.1} parent=11 // pred_check
          %p118 = pneg %p56
        $region14: #{tpu_custom_call.1} parent=11 // pred_check_branch
          %120 = sbr.rel (%p118) target = $region16
        $region15: #{tpu_custom_call.1} parent=11 // pred_region
          _
        $region16: #{tpu_custom_call.1} parent=11 // pred_fallthru
          _
        // Predicated region
        $region17: #{tpu_custom_call.1} parent=11 // pred_check
          %p121 = pneg %p77
        $region18: #{tpu_custom_call.1} parent=11 // pred_check_branch
          %123 = sbr.rel (%p121) target = $region20
        $region19: #{tpu_custom_call.1} parent=11 // pred_region
          _
        $region20: #{tpu_custom_call.1} parent=11 // pred_fallthru
          _
      $region12: #{tpu_custom_call.1} parent=5 // pred_fallthru
        _
      %p124 = scmp.lt.s32.totalorder %s9, 2
      // Predicated region
      $region21: #{tpu_custom_call.1} parent=5 // pred_check
        %p125 = pneg %p124
      $region22: #{tpu_custom_call.1} parent=5 // pred_check_branch
        %127 = sbr.rel (%p125) target = $region24
      $region23: #{tpu_custom_call.1} parent=5 // pred_region
        // Predicated region
        $region25: #{tpu_custom_call.1} parent=23 // pred_check
          %p128 = pneg %p29
        $region26: #{tpu_custom_call.1} parent=23 // pred_check_branch
          %130 = sbr.rel (%p128) target = $region28
        $region27: #{tpu_custom_call.1} parent=23 // pred_region
          %s131 = smul.u32 16, %s9
          %s132 = ssub.s32 25, %s131
          %p133 = scmp.lt.s32.totalorder %s132, 16
          %s134 = scalar_select %p133, %s132, 16
          %s135 = smul.u32 128, %s134
          %p136 = scmp.lt.s32.totalorder %s131, 24
          %s137 = scalar_select %p136, %s131, 24
          %s138 = smul.addr %s137, 8
          %s139 = scalar_lea.vmem %s0, %s138
          %s140 = smul.u32 16, %s9
          %s141 = ssub.s32 25, %s140
          %p142 = scmp.lt.s32.totalorder %s141, 16
          %s143 = scalar_select %p142, %s141, 16
          %s144 = smul.u32 128, %s143
        $region28: #{tpu_custom_call.1} parent=23 // pred_fallthru
          _
      $region24: #{tpu_custom_call.1} parent=5 // pred_fallthru
        _
      %p145 = scmp.le.s32.totalorder 1, %s9
      %p146 = scmp.lt.s32.totalorder %s9, 3
      %p147 = pnand %p145, %p146
      %p148 = pneg %p147
      // Predicated region
      $region29: #{tpu_custom_call.1} parent=5 // pred_check
        _
      $region30: #{tpu_custom_call.1} parent=5 // pred_check_branch
        %150 = sbr.rel (%p147) target = $region32
      $region31: #{tpu_custom_call.1} parent=5 // pred_region
        %s151 = ssub.s32 %s9, 1
        %s152 = smul.u32 16, %s14
        %s153 = ssub.s32 25, %s152
        %p154 = scmp.lt.s32.totalorder %s153, 16
        %s155 = scalar_select %p154, %s153, 16
        %s156 = smul.u32 128, %s155
        %p157 = scmp.lt.s32.totalorder %s152, 24
        %s158 = scalar_select %p157, %s152, 24
        %s159 = smul.addr %s158, 8
        %s160 = scalar_lea.vmem %s0, %s159
        %p161 = pneg %p35
        %p162 = pneg %p32
        %p163 = pneg %p56
        %p164 = pneg %p53
        %p165 = pneg %p77
        %p166 = pneg %p74
        %p167 = pneg %p103
        %p168 = pneg %p100
        %s169 = sand.u32 %s90, 1
        %s170 = sand.u32 %s90, 1
        %s171 = smul.addr %s170, 128
        %s172 = scalar_lea.vmem [#allocation2], %s171
        %s173 = smul.u32 16, %s14
        %s174 = ssub.s32 25, %s173
        %p175 = scmp.lt.s32.totalorder %s174, 16
        %s176 = scalar_select %p175, %s174, 16
        %s177 = smul.u32 128, %s176
        %p178 = scmp.lt.s32.totalorder %s173, 24
        %s179 = scalar_select %p178, %s173, 24
        %s180 = smul.addr %s179, 8
        %s181 = scalar_lea.vmem %s0, %s180
        %s182 = smul.u32 16, %s14
        %s183 = ssub.s32 25, %s182
        %p184 = scmp.lt.s32.totalorder %s183, 16
        %s185 = scalar_select %p184, %s183, 16
        %s186 = smul.u32 128, %s185
        %s187 = smul.u32 16, %s14
        %s188 = ssub.s32 25, %s187
        %p189 = scmp.lt.s32.totalorder %s188, 16
        %s190 = scalar_select %p189, %s188, 16
        %s191 = smul.u32 128, %s190
        %v193 = vld [vmem:[%s1] sm:$0xf]
        %v194 = vld [vmem:[%s1 + $0x4] sm:$0xf]
        %v195 = vld [vmem:[%s1 + $0x8] sm:$0xf]
        %v196 = vld [vmem:[%s1 + $0xc] sm:$0xf]
        %v197 = vld [vmem:[%s1 + $0x10] sm:$0xf]
        %v198 = vld [vmem:[%s1 + $0x14] sm:$0xf]
        %v199 = vld [vmem:[%s1 + $0x18] sm:$0xf]
        %v200 = vld [vmem:[%s1 + $0x1c] sm:$0xf]
        %v201 = vld [vmem:[%s1 + $0x20] sm:$0xf]
        %v202 = vld [vmem:[%s1 + $0x24] sm:$0xf]
        %v203 = vld [vmem:[%s1 + $0x28] sm:$0xf]
        %v204 = vld [vmem:[%s1 + $0x2c] sm:$0xf]
        %v205 = vld [vmem:[%s1 + $0x30] sm:$0xf]
        %v206 = vld [vmem:[%s1 + $0x34] sm:$0xf]
        %v207 = vld [vmem:[%s1 + $0x38] sm:$0xf]
        %v208 = vld [vmem:[%s1 + $0x3c] sm:$0xf]
        %v209 = vld [vmem:[%s1 + $0x40] sm:$0xf]
        %v210 = vld [vmem:[%s1 + $0x44] sm:$0xf]
        %v211 = vld [vmem:[%s1 + $0x48] sm:$0xf]
        %v212 = vld [vmem:[%s1 + $0x4c] sm:$0xf]
        %v213 = vld [vmem:[%s1 + $0x50] sm:$0xf]
        %v214 = vld [vmem:[%s1 + $0x54] sm:$0xf]
        %v215 = vld [vmem:[%s1 + $0x58] sm:$0xf]
        %v216 = vld [vmem:[%s1 + $0x5c] sm:$0xf]
        %v217 = vld [vmem:[%s1 + $0x60] sm:$0xf]
        %v218 = vld [vmem:[%s1 + $0x64] sm:$0xf]
        %v219 = vld [vmem:[%s1 + $0x68] sm:$0xf]
        %v220 = vld [vmem:[%s1 + $0x6c] sm:$0xf]
        %v221 = vld [vmem:[%s1 + $0x70] sm:$0xf]
        %v222 = vld [vmem:[%s1 + $0x74] sm:$0xf]
        %v223 = vld [vmem:[%s1 + $0x78] sm:$0xf]
        %v224 = vld [vmem:[%s1 + $0x7c] sm:$0xf]
        %v225 = vld [vmem:[%s1 + $0x80] sm:$0xf]
        %v226 = vld [vmem:[%s1 + $0x84] sm:$0xf]
        %v227 = vld [vmem:[%s1 + $0x88] sm:$0xf]
        %v228 = vld [vmem:[%s1 + $0x8c] sm:$0xf]
        %v229 = vld [vmem:[%s2] sm:$0x1]
        %v230 = vld [vmem:[%s2 + $0x1] sm:$0x1]
        %v231 = vld [vmem:[%s2 + $0x2] sm:$0x1]
        %v232 = vld [vmem:[%s2 + $0x3] sm:$0x1]
        %v233 = vld [vmem:[%s2 + $0x4] sm:$0x1]
        %v234 = vld [vmem:[%s2 + $0x5] sm:$0x1]
        %v235 = vld [vmem:[%s2 + $0x6] sm:$0x1]
        %v236 = vld [vmem:[%s181] sm:$0xff]
        %v237 = vld [vmem:[%s181 + $0x8] sm:$0xff]
        %v238 = vld [vmem:[%s181 + $0x10] sm:$0xff]
        %v239 = vld [vmem:[%s181 + $0x18] sm:$0xff]
        %v240 = vld [vmem:[%s181 + $0x20] sm:$0xff]
        %v241 = vld [vmem:[%s181 + $0x28] sm:$0xff]
        %v242 = vld [vmem:[%s181 + $0x30] sm:$0xff]
        %v243 = vld [vmem:[%s181 + $0x38] sm:$0xff]
        %v244 = vld [vmem:[%s181 + $0x40] sm:$0xff]
        %v245 = vld [vmem:[%s181 + $0x48] sm:$0xff]
        %v246 = vld [vmem:[%s181 + $0x50] sm:$0xff]
        %v247 = vld [vmem:[%s181 + $0x58] sm:$0xff]
        %v248 = vld [vmem:[%s181 + $0x60] sm:$0xff]
        %v249 = vld [vmem:[%s181 + $0x68] sm:$0xff]
        %v250 = vld [vmem:[%s181 + $0x70] sm:$0xff]
        %v251 = vld [vmem:[%s181 + $0x78] sm:$0xff]
        %v252 = vpack.c.bf16 %v237, %v236
        %v253 = vpack.c.bf16 %v239, %v238
        %v254 = vpack.c.bf16 %v241, %v240
        %v255 = vpack.c.bf16 %v243, %v242
        %v256 = vpack.c.bf16 %v245, %v244
        %v257 = vpack.c.bf16 %v247, %v246
        %v258 = vpack.c.bf16 %v249, %v248
        %v259 = vpack.c.bf16 %v251, %v250
        %v260 = vlaneseq
        %v261 = vshrl.u32 %v260, 7
        %v262 = vsub.s32 0, %v261
        %v263 = vrot.slane %v229, %v262
        %v268 = vunpack.c.l.b16 %v193
        %v269 = vunpack.c.l.b16 %v194
        %v270 = vunpack.c.l.b16 %v195
        %v271 = vunpack.c.l.b16 %v196
        %v272 = vpack.c.b16 %v269, %v268
        %v273 = vpack.c.b16 %v271, %v270
        %vm276 = vcmask 261120
        %v278 = vsel %vm276, %v252, 0
        %v281 = vsel %vm276, %v253, 0
        %v284 = vsel %vm276, %v254, 0
        %v287 = vsel %vm276, %v255, 0
        %v290 = vsel %vm276, %v256, 0
        %v293 = vsel %vm276, %v257, 0
        %v296 = vsel %vm276, %v258, 0
        %v299 = vsel %vm276, %v259, 0
        %301 = vmatprep.subr.bf16.mxu0 0
        %302 = vmatpush1.bf16.msra.mxu0 %v272
        %303 = vmatprep.subr.bf16.mxu0 0
        %304 = vmatpush1.bf16.msra.mxu0 %v273
        %305 = vmatprep.subr.bf16.mxu0 0
        %306 = vmatpush1.bf16.msra.mxu0 0
        %307 = vmatprep.subr.bf16.mxu0 0
        %308 = vmatpush1.bf16.msra.mxu0 0
        %309 = vmatprep.subr.bf16.mxu0 0
        %310 = vmatpush1.bf16.msra.mxu0 0
        %311 = vmatprep.subr.bf16.mxu0 0
        %312 = vmatpush1.bf16.msra.mxu0 0
        %313 = vmatprep.subr.bf16.mxu0 0
        %314 = vmatpush1.bf16.msra.mxu0 0
        %315 = vmatprep.subr.bf16.mxu0 0
        %316 = vmatpush1.bf16.msra.mxu0 0
        %317 = vmatprep.subr.bf16.mxu0 0
        %318 = vmatpush1.bf16.msra.mxu0 0
        %319 = vmatprep.subr.bf16.mxu0 0
        %320 = vmatpush1.bf16.msra.mxu0 0
        %321 = vmatprep.subr.bf16.mxu0 0
        %322 = vmatpush1.bf16.msra.mxu0 0
        %323 = vmatprep.subr.bf16.mxu0 0
        %324 = vmatpush1.bf16.msra.mxu0 0
        %325 = vmatprep.subr.bf16.mxu0 0
        %326 = vmatpush1.bf16.msra.mxu0 0
        %327 = vmatprep.subr.bf16.mxu0 0
        %328 = vmatpush1.bf16.msra.mxu0 0
        %329 = vmatprep.subr.bf16.mxu0 0
        %330 = vmatpush1.bf16.msra.mxu0 0
        %331 = vmatprep.subr.bf16.mxu0 0
        %332 = vmatpush1.bf16.msra.mxu0 0
        %333 = vmatprep.mubr.bf16.mxu0 0
        %334 = vmatmul.mubr.bf16.gmra.mrb[0].mxu0 %v278
        %v335 = vpop.f32.mrb[0].mxu0
        %v336 = vadd.f32 %v263, %v335
        %v337 = vpop.f32.mrb[0].mxu0
        %v338 = vpop.f32.mrb[0].mxu0
        %v339 = vadd.f32 %v263, %v338
        %v340 = vpop.f32.mrb[0].mxu0
        %341 = vmatprep.mubr.bf16.mxu0 0
        %342 = vmatmul.mubr.bf16.gmra.mrb[0].mxu0 %v281
        %v343 = vpop.f32.mrb[0].mxu0
        %v344 = vadd.f32 %v263, %v343
        %v345 = vpop.f32.mrb[0].mxu0
        %v346 = vpop.f32.mrb[0].mxu0
        %v347 = vadd.f32 %v263, %v346
        %v348 = vpop.f32.mrb[0].mxu0
        %349 = vmatprep.mubr.bf16.mxu0 0
        %350 = vmatmul.mubr.bf16.gmra.mrb[0].mxu0 %v284
        %v351 = vpop.f32.mrb[0].mxu0
        %v352 = vadd.f32 %v263, %v351
        %v353 = vpop.f32.mrb[0].mxu0
        %v354 = vpop.f32.mrb[0].mxu0
        %v355 = vadd.f32 %v263, %v354
        %v356 = vpop.f32.mrb[0].mxu0
        %357 = vmatprep.mubr.bf16.mxu0 0
        %358 = vmatmul.mubr.bf16.gmra.mrb[0].mxu0 %v287
        %v359 = vpop.f32.mrb[0].mxu0
        %v360 = vadd.f32 %v263, %v359
        %v361 = vpop.f32.mrb[0].mxu0
        %v362 = vpop.f32.mrb[0].mxu0
        %v363 = vadd.f32 %v263, %v362
        %v364 = vpop.f32.mrb[0].mxu0
        %365 = vmatprep.mubr.bf16.mxu0 0
        %366 = vmatmul.mubr.bf16.gmra.mrb[0].mxu0 %v290
        %v367 = vpop.f32.mrb[0].mxu0
        %v368 = vadd.f32 %v263, %v367
        %v369 = vpop.f32.mrb[0].mxu0
        %v370 = vpop.f32.mrb[0].mxu0
        %v371 = vadd.f32 %v263, %v370
        %v372 = vpop.f32.mrb[0].mxu0
        %373 = vmatprep.mubr.bf16.mxu0 0
        %374 = vmatmul.mubr.bf16.gmra.mrb[0].mxu0 %v293
        %v375 = vpop.f32.mrb[0].mxu0
        %v376 = vadd.f32 %v263, %v375
        %v377 = vpop.f32.mrb[0].mxu0
        %v378 = vpop.f32.mrb[0].mxu0
        %v379 = vadd.f32 %v263, %v378
        %v380 = vpop.f32.mrb[0].mxu0
        %381 = vmatprep.mubr.bf16.mxu0 0
        %382 = vmatmul.mubr.bf16.gmra.mrb[0].mxu0 %v296
        %v383 = vpop.f32.mrb[0].mxu0
        %v384 = vadd.f32 %v263, %v383
        %v385 = vpop.f32.mrb[0].mxu0
        %v386 = vpop.f32.mrb[0].mxu0
        %v387 = vadd.f32 %v263, %v386
        %v388 = vpop.f32.mrb[0].mxu0
        %389 = vmatprep.mubr.bf16.mxu0 0
        %390 = vmatmul.mubr.bf16.gmra.mrb[0].mxu0 %v299
        %v391 = vpop.f32.mrb[0].mxu0
        %v392 = vadd.f32 %v263, %v391
        %v393 = vpop.f32.mrb[0].mxu0
        %v394 = vpop.f32.mrb[0].mxu0
        %v395 = vadd.f32 %v263, %v394
        %v396 = vpop.f32.mrb[0].mxu0
        %397 = vdwg.mxu0
        %398 = vadd.xlane.f32.xlu0 %v336
        %v399 = vpop.xlane.xlu0 %398
        %400 = vadd.xlane.f32.xlu0 %v339
        %v401 = vpop.xlane.xlu0 %400
        %402 = vadd.xlane.f32.xlu0 %v344
        %v403 = vpop.xlane.xlu0 %402
        %404 = vadd.xlane.f32.xlu0 %v347
        %v405 = vpop.xlane.xlu0 %404
        %406 = vadd.xlane.f32.xlu0 %v352
        %v407 = vpop.xlane.xlu0 %406
        %408 = vadd.xlane.f32.xlu0 %v355
        %v409 = vpop.xlane.xlu0 %408
        %410 = vadd.xlane.f32.xlu0 %v360
        %v411 = vpop.xlane.xlu0 %410
        %412 = vadd.xlane.f32.xlu0 %v363
        %v413 = vpop.xlane.xlu0 %412
        %414 = vadd.xlane.f32.xlu0 %v368
        %v415 = vpop.xlane.xlu0 %414
        %416 = vadd.xlane.f32.xlu0 %v371
        %v417 = vpop.xlane.xlu0 %416
        %418 = vadd.xlane.f32.xlu0 %v376
        %v419 = vpop.xlane.xlu0 %418
        %420 = vadd.xlane.f32.xlu0 %v379
        %v421 = vpop.xlane.xlu0 %420
        %422 = vadd.xlane.f32.xlu0 %v384
        %v423 = vpop.xlane.xlu0 %422
        %424 = vadd.xlane.f32.xlu0 %v387
        %v425 = vpop.xlane.xlu0 %424
        %426 = vadd.xlane.f32.xlu0 %v392
        %v427 = vpop.xlane.xlu0 %426
        %428 = vadd.xlane.f32.xlu0 %v395
        %v429 = vpop.xlane.xlu0 %428
        %v430 = vmul.f32 %v399, 0.015625
        %v431 = vmul.f32 %v401, 0.015625
        %v432 = vmul.f32 %v403, 0.015625
        %v433 = vmul.f32 %v405, 0.015625
        %v434 = vmul.f32 %v407, 0.015625
        %v435 = vmul.f32 %v409, 0.015625
        %v436 = vmul.f32 %v411, 0.015625
        %v437 = vmul.f32 %v413, 0.015625
        %v438 = vmul.f32 %v415, 0.015625
        %v439 = vmul.f32 %v417, 0.015625
        %v440 = vmul.f32 %v419, 0.015625
        %v441 = vmul.f32 %v421, 0.015625
        %v442 = vmul.f32 %v423, 0.015625
        %v443 = vmul.f32 %v425, 0.015625
        %v444 = vmul.f32 %v427, 0.015625
        %v445 = vmul.f32 %v429, 0.015625
        %v446 = vmul.f32 %v336, %v336
        %v447 = vmul.f32 %v339, %v339
        %v448 = vmul.f32 %v344, %v344
        %v449 = vmul.f32 %v347, %v347
        %v450 = vmul.f32 %v352, %v352
        %v451 = vmul.f32 %v355, %v355
        %v452 = vmul.f32 %v360, %v360
        %v453 = vmul.f32 %v363, %v363
        %v454 = vmul.f32 %v368, %v368
        %v455 = vmul.f32 %v371, %v371
        %v456 = vmul.f32 %v376, %v376
        %v457 = vmul.f32 %v379, %v379
        %v458 = vmul.f32 %v384, %v384
        %v459 = vmul.f32 %v387, %v387
        %v460 = vmul.f32 %v392, %v392
        %v461 = vmul.f32 %v395, %v395
        %462 = vadd.xlane.f32.xlu0 %v446
        %v463 = vpop.xlane.xlu0 %462
        %464 = vadd.xlane.f32.xlu0 %v447
        %v465 = vpop.xlane.xlu0 %464
        %466 = vadd.xlane.f32.xlu0 %v448
        %v467 = vpop.xlane.xlu0 %466
        %468 = vadd.xlane.f32.xlu0 %v449
        %v469 = vpop.xlane.xlu0 %468
        %470 = vadd.xlane.f32.xlu0 %v450
        %v471 = vpop.xlane.xlu0 %470
        %472 = vadd.xlane.f32.xlu0 %v451
        %v473 = vpop.xlane.xlu0 %472
        %474 = vadd.xlane.f32.xlu0 %v452
        %v475 = vpop.xlane.xlu0 %474
        %476 = vadd.xlane.f32.xlu0 %v453
        %v477 = vpop.xlane.xlu0 %476
        %478 = vadd.xlane.f32.xlu0 %v454
        %v479 = vpop.xlane.xlu0 %478
        %480 = vadd.xlane.f32.xlu0 %v455
        %v481 = vpop.xlane.xlu0 %480
        %482 = vadd.xlane.f32.xlu0 %v456
        %v483 = vpop.xlane.xlu0 %482
        %484 = vadd.xlane.f32.xlu0 %v457
        %v485 = vpop.xlane.xlu0 %484
        %486 = vadd.xlane.f32.xlu0 %v458
        %v487 = vpop.xlane.xlu0 %486
        %488 = vadd.xlane.f32.xlu0 %v459
        %v489 = vpop.xlane.xlu0 %488
        %490 = vadd.xlane.f32.xlu0 %v460
        %v491 = vpop.xlane.xlu0 %490
        %492 = vadd.xlane.f32.xlu0 %v461
        %v493 = vpop.xlane.xlu0 %492
        %v494 = vmul.f32 %v463, 0.015625
        %v495 = vmul.f32 %v465, 0.015625
        %v496 = vmul.f32 %v467, 0.015625
        %v497 = vmul.f32 %v469, 0.015625
        %v498 = vmul.f32 %v471, 0.015625
        %v499 = vmul.f32 %v473, 0.015625
        %v500 = vmul.f32 %v475, 0.015625
        %v501 = vmul.f32 %v477, 0.015625
        %v502 = vmul.f32 %v479, 0.015625
        %v503 = vmul.f32 %v481, 0.015625
        %v504 = vmul.f32 %v483, 0.015625
        %v505 = vmul.f32 %v485, 0.015625
        %v506 = vmul.f32 %v487, 0.015625
        %v507 = vmul.f32 %v489, 0.015625
        %v508 = vmul.f32 %v491, 0.015625
        %v509 = vmul.f32 %v493, 0.015625
        %v510 = vmul.f32 %v430, %v430
        %v511 = vmul.f32 %v431, %v431
        %v512 = vmul.f32 %v432, %v432
        %v513 = vmul.f32 %v433, %v433
        %v514 = vmul.f32 %v434, %v434
        %v515 = vmul.f32 %v435, %v435
        %v516 = vmul.f32 %v436, %v436
        %v517 = vmul.f32 %v437, %v437
        %v518 = vmul.f32 %v438, %v438
        %v519 = vmul.f32 %v439, %v439
        %v520 = vmul.f32 %v440, %v440
        %v521 = vmul.f32 %v441, %v441
        %v522 = vmul.f32 %v442, %v442
        %v523 = vmul.f32 %v443, %v443
        %v524 = vmul.f32 %v444, %v444
        %v525 = vmul.f32 %v445, %v445
        %v526 = vsub.f32 %v494, %v510
        %v527 = vsub.f32 %v495, %v511
        %v528 = vsub.f32 %v496, %v512
        %v529 = vsub.f32 %v497, %v513
        %v530 = vsub.f32 %v498, %v514
        %v531 = vsub.f32 %v499, %v515
        %v532 = vsub.f32 %v500, %v516
        %v533 = vsub.f32 %v501, %v517
        %v534 = vsub.f32 %v502, %v518
        %v535 = vsub.f32 %v503, %v519
        %v536 = vsub.f32 %v504, %v520
        %v537 = vsub.f32 %v505, %v521
        %v538 = vsub.f32 %v506, %v522
        %v539 = vsub.f32 %v507, %v523
        %v540 = vsub.f32 %v508, %v524
        %v541 = vsub.f32 %v509, %v525
        %v542 = vsub.f32 %v336, %v430
        %v543 = vsub.f32 %v339, %v431
        %v544 = vsub.f32 %v344, %v432
        %v545 = vsub.f32 %v347, %v433
        %v546 = vsub.f32 %v352, %v434
        %v547 = vsub.f32 %v355, %v435
        %v548 = vsub.f32 %v360, %v436
        %v549 = vsub.f32 %v363, %v437
        %v550 = vsub.f32 %v368, %v438
        %v551 = vsub.f32 %v371, %v439
        %v552 = vsub.f32 %v376, %v440
        %v553 = vsub.f32 %v379, %v441
        %v554 = vsub.f32 %v384, %v442
        %v555 = vsub.f32 %v387, %v443
        %v556 = vsub.f32 %v392, %v444
        %v557 = vsub.f32 %v395, %v445
        %v558 = vadd.f32 %v526, 1e-05
        %v559 = vadd.f32 %v527, 1e-05
        %v560 = vadd.f32 %v528, 1e-05
        %v561 = vadd.f32 %v529, 1e-05
        %v562 = vadd.f32 %v530, 1e-05
        %v563 = vadd.f32 %v531, 1e-05
        %v564 = vadd.f32 %v532, 1e-05
        %v565 = vadd.f32 %v533, 1e-05
        %v566 = vadd.f32 %v534, 1e-05
        %v567 = vadd.f32 %v535, 1e-05
        %v568 = vadd.f32 %v536, 1e-05
        %v569 = vadd.f32 %v537, 1e-05
        %v570 = vadd.f32 %v538, 1e-05
        %v571 = vadd.f32 %v539, 1e-05
        %v572 = vadd.f32 %v540, 1e-05
        %v573 = vadd.f32 %v541, 1e-05
        %v574 = vrsqrt.pop %v558
        %v575 = vrsqrt.pop %v559
        %v576 = vrsqrt.pop %v560
        %v577 = vrsqrt.pop %v561
        %v578 = vrsqrt.pop %v562
        %v579 = vrsqrt.pop %v563
        %v580 = vrsqrt.pop %v564
        %v581 = vrsqrt.pop %v565
        %v582 = vrsqrt.pop %v566
        %v583 = vrsqrt.pop %v567
        %v584 = vrsqrt.pop %v568
        %v585 = vrsqrt.pop %v569
        %v586 = vrsqrt.pop %v570
        %v587 = vrsqrt.pop %v571
        %v588 = vrsqrt.pop %v572
        %v589 = vrsqrt.pop %v573
        %v590 = vmul.f32 %v542, %v574
        %v591 = vmul.f32 %v543, %v575
        %v592 = vmul.f32 %v544, %v576
        %v593 = vmul.f32 %v545, %v577
        %v594 = vmul.f32 %v546, %v578
        %v595 = vmul.f32 %v547, %v579
        %v596 = vmul.f32 %v548, %v580
        %v597 = vmul.f32 %v549, %v581
        %v598 = vmul.f32 %v550, %v582
        %v599 = vmul.f32 %v551, %v583
        %v600 = vmul.f32 %v552, %v584
        %v601 = vmul.f32 %v553, %v585
        %v602 = vmul.f32 %v554, %v586
        %v603 = vmul.f32 %v555, %v587
        %v604 = vmul.f32 %v556, %v588
        %v605 = vmul.f32 %v557, %v589
        %v606 = vlaneseq
        %v607 = vshrl.u32 %v606, 7
        %v608 = vsub.s32 0, %v607
        %v609 = vrot.slane %v230, %v608
        %v610 = vmul.f32 %v590, %v609
        %v611 = vmul.f32 %v591, %v609
        %v612 = vmul.f32 %v592, %v609
        %v613 = vmul.f32 %v593, %v609
        %v614 = vmul.f32 %v594, %v609
        %v615 = vmul.f32 %v595, %v609
        %v616 = vmul.f32 %v596, %v609
        %v617 = vmul.f32 %v597, %v609
        %v618 = vmul.f32 %v598, %v609
        %v619 = vmul.f32 %v599, %v609
        %v620 = vmul.f32 %v600, %v609
        %v621 = vmul.f32 %v601, %v609
        %v622 = vmul.f32 %v602, %v609
        %v623 = vmul.f32 %v603, %v609
        %v624 = vmul.f32 %v604, %v609
        %v625 = vmul.f32 %v605, %v609
        %v626 = vlaneseq
        %v627 = vshrl.u32 %v626, 7
        %v628 = vsub.s32 0, %v627
        %v629 = vrot.slane %v231, %v628
        %v630 = vadd.f32 %v610, %v629
        %v631 = vadd.f32 %v611, %v629
        %v632 = vadd.f32 %v612, %v629
        %v633 = vadd.f32 %v613, %v629
        %v634 = vadd.f32 %v614, %v629
        %v635 = vadd.f32 %v615, %v629
        %v636 = vadd.f32 %v616, %v629
        %v637 = vadd.f32 %v617, %v629
        %v638 = vadd.f32 %v618, %v629
        %v639 = vadd.f32 %v619, %v629
        %v640 = vadd.f32 %v620, %v629
        %v641 = vadd.f32 %v621, %v629
        %v642 = vadd.f32 %v622, %v629
        %v643 = vadd.f32 %v623, %v629
        %v644 = vadd.f32 %v624, %v629
        %v645 = vadd.f32 %v625, %v629
        %v646 = vmax.f32 %v630, 0.0
        %v647 = vmax.f32 %v631, 0.0
        %v648 = vmax.f32 %v632, 0.0
        %v649 = vmax.f32 %v633, 0.0
        %v650 = vmax.f32 %v634, 0.0
        %v651 = vmax.f32 %v635, 0.0
        %v652 = vmax.f32 %v636, 0.0
        %v653 = vmax.f32 %v637, 0.0
        %v654 = vmax.f32 %v638, 0.0
        %v655 = vmax.f32 %v639, 0.0
        %v656 = vmax.f32 %v640, 0.0
        %v657 = vmax.f32 %v641, 0.0
        %v658 = vmax.f32 %v642, 0.0
        %v659 = vmax.f32 %v643, 0.0
        %v660 = vmax.f32 %v644, 0.0
        %v661 = vmax.f32 %v645, 0.0
        %v662 = vpack.c.bf16 %v647, %v646
        %v663 = vpack.c.bf16 %v649, %v648
        %v664 = vpack.c.bf16 %v651, %v650
        %v665 = vpack.c.bf16 %v653, %v652
        %v666 = vpack.c.bf16 %v655, %v654
        %v667 = vpack.c.bf16 %v657, %v656
        %v668 = vpack.c.bf16 %v659, %v658
        %v669 = vpack.c.bf16 %v661, %v660
        %v670 = vlaneseq
        %v671 = vshrl.u32 %v670, 7
        %v672 = vsub.s32 0, %v671
        %v673 = vrot.slane %v232, %v672
        %v690 = vunpack.c.l.b16 %v197
        %v691 = vunpack.c.l.b16 %v198
        %v692 = vunpack.c.l.b16 %v199
        %v693 = vunpack.c.l.b16 %v200
        %v694 = vunpack.c.l.b16 %v201
        %v695 = vunpack.c.l.b16 %v202
        %v696 = vunpack.c.l.b16 %v203
        %v697 = vunpack.c.l.b16 %v204
        %v698 = vunpack.c.l.b16 %v205
        %v699 = vunpack.c.l.b16 %v206
        %v700 = vunpack.c.l.b16 %v207
        %v701 = vunpack.c.l.b16 %v208
        %v702 = vunpack.c.l.b16 %v209
        %v703 = vunpack.c.l.b16 %v210
        %v704 = vunpack.c.l.b16 %v211
        %v705 = vunpack.c.l.b16 %v212
        %v706 = vpack.c.b16 %v691, %v690
        %v707 = vpack.c.b16 %v693, %v692
        %v708 = vpack.c.b16 %v695, %v694
        %v709 = vpack.c.b16 %v697, %v696
        %v710 = vpack.c.b16 %v699, %v698
        %v711 = vpack.c.b16 %v701, %v700
        %v712 = vpack.c.b16 %v703, %v702
        %v713 = vpack.c.b16 %v705, %v704
        %722 = vmatprep.subr.bf16.mxu0 0
        %723 = vmatpush1.bf16.msra.mxu0 %v706
        %724 = vmatprep.subr.bf16.mxu0 0
        %725 = vmatpush1.bf16.msra.mxu0 %v707
        %726 = vmatprep.subr.bf16.mxu0 0
        %727 = vmatpush1.bf16.msra.mxu0 %v708
        %728 = vmatprep.subr.bf16.mxu0 0
        %729 = vmatpush1.bf16.msra.mxu0 %v709
        %730 = vmatprep.subr.bf16.mxu0 0
        %731 = vmatpush1.bf16.msra.mxu0 %v710
        %732 = vmatprep.subr.bf16.mxu0 0
        %733 = vmatpush1.bf16.msra.mxu0 %v711
        %734 = vmatprep.subr.bf16.mxu0 0
        %735 = vmatpush1.bf16.msra.mxu0 %v712
        %736 = vmatprep.subr.bf16.mxu0 0
        %737 = vmatpush1.bf16.msra.mxu0 %v713
        %738 = vmatprep.subr.bf16.mxu0 0
        %739 = vmatpush1.bf16.msra.mxu0 0
        %740 = vmatprep.subr.bf16.mxu0 0
        %741 = vmatpush1.bf16.msra.mxu0 0
        %742 = vmatprep.subr.bf16.mxu0 0
        %743 = vmatpush1.bf16.msra.mxu0 0
        %744 = vmatprep.subr.bf16.mxu0 0
        %745 = vmatpush1.bf16.msra.mxu0 0
        %746 = vmatprep.subr.bf16.mxu0 0
        %747 = vmatpush1.bf16.msra.mxu0 0
        %748 = vmatprep.subr.bf16.mxu0 0
        %749 = vmatpush1.bf16.msra.mxu0 0
        %750 = vmatprep.subr.bf16.mxu0 0
        %751 = vmatpush1.bf16.msra.mxu0 0
        %752 = vmatprep.subr.bf16.mxu0 0
        %753 = vmatpush1.bf16.msra.mxu0 0
        %754 = vmatprep.mubr.bf16.mxu0 0
        %755 = vmatmul.mubr.bf16.gmra.mrb[0].mxu0 %v662
        %v756 = vpop.f32.mrb[0].mxu0
        %v757 = vadd.f32 %v673, %v756
        %v758 = vpop.f32.mrb[0].mxu0
        %v759 = vpop.f32.mrb[0].mxu0
        %v760 = vadd.f32 %v673, %v759
        %v761 = vpop.f32.mrb[0].mxu0
        %762 = vmatprep.mubr.bf16.mxu0 0
        %763 = vmatmul.mubr.bf16.gmra.mrb[0].mxu0 %v663
        %v764 = vpop.f32.mrb[0].mxu0
        %v765 = vadd.f32 %v673, %v764
        %v766 = vpop.f32.mrb[0].mxu0
        %v767 = vpop.f32.mrb[0].mxu0
        %v768 = vadd.f32 %v673, %v767
        %v769 = vpop.f32.mrb[0].mxu0
        %770 = vmatprep.mubr.bf16.mxu0 0
        %771 = vmatmul.mubr.bf16.gmra.mrb[0].mxu0 %v664
        %v772 = vpop.f32.mrb[0].mxu0
        %v773 = vadd.f32 %v673, %v772
        %v774 = vpop.f32.mrb[0].mxu0
        %v775 = vpop.f32.mrb[0].mxu0
        %v776 = vadd.f32 %v673, %v775
        %v777 = vpop.f32.mrb[0].mxu0
        %778 = vmatprep.mubr.bf16.mxu0 0
        %779 = vmatmul.mubr.bf16.gmra.mrb[0].mxu0 %v665
        %v780 = vpop.f32.mrb[0].mxu0
        %v781 = vadd.f32 %v673, %v780
        %v782 = vpop.f32.mrb[0].mxu0
        %v783 = vpop.f32.mrb[0].mxu0
        %v784 = vadd.f32 %v673, %v783
        %v785 = vpop.f32.mrb[0].mxu0
        %786 = vmatprep.mubr.bf16.mxu0 0
        %787 = vmatmul.mubr.bf16.gmra.mrb[0].mxu0 %v666
        %v788 = vpop.f32.mrb[0].mxu0
        %v789 = vadd.f32 %v673, %v788
        %v790 = vpop.f32.mrb[0].mxu0
        %v791 = vpop.f32.mrb[0].mxu0
        %v792 = vadd.f32 %v673, %v791
        %v793 = vpop.f32.mrb[0].mxu0
        %794 = vmatprep.mubr.bf16.mxu0 0
        %795 = vmatmul.mubr.bf16.gmra.mrb[0].mxu0 %v667
        %v796 = vpop.f32.mrb[0].mxu0
        %v797 = vadd.f32 %v673, %v796
        %v798 = vpop.f32.mrb[0].mxu0
        %v799 = vpop.f32.mrb[0].mxu0
        %v800 = vadd.f32 %v673, %v799
        %v801 = vpop.f32.mrb[0].mxu0
        %802 = vmatprep.mubr.bf16.mxu0 0
        %803 = vmatmul.mubr.bf16.gmra.mrb[0].mxu0 %v668
        %v804 = vpop.f32.mrb[0].mxu0
        %v805 = vadd.f32 %v673, %v804
        %v806 = vpop.f32.mrb[0].mxu0
        %v807 = vpop.f32.mrb[0].mxu0
        %v808 = vadd.f32 %v673, %v807
        %v809 = vpop.f32.mrb[0].mxu0
        %810 = vmatprep.mubr.bf16.mxu0 0
        %811 = vmatmul.mubr.bf16.gmra.mrb[0].mxu0 %v669
        %v812 = vpop.f32.mrb[0].mxu0
        %v813 = vadd.f32 %v673, %v812
        %v814 = vpop.f32.mrb[0].mxu0
        %v815 = vpop.f32.mrb[0].mxu0
        %v816 = vadd.f32 %v673, %v815
        %v817 = vpop.f32.mrb[0].mxu0
        %818 = vdwg.mxu0
        %819 = vadd.xlane.f32.xlu0 %v757
        %v820 = vpop.xlane.xlu0 %819
        %821 = vadd.xlane.f32.xlu0 %v760
        %v822 = vpop.xlane.xlu0 %821
        %823 = vadd.xlane.f32.xlu0 %v765
        %v824 = vpop.xlane.xlu0 %823
        %825 = vadd.xlane.f32.xlu0 %v768
        %v826 = vpop.xlane.xlu0 %825
        %827 = vadd.xlane.f32.xlu0 %v773
        %v828 = vpop.xlane.xlu0 %827
        %829 = vadd.xlane.f32.xlu0 %v776
        %v830 = vpop.xlane.xlu0 %829
        %831 = vadd.xlane.f32.xlu0 %v781
        %v832 = vpop.xlane.xlu0 %831
        %833 = vadd.xlane.f32.xlu0 %v784
        %v834 = vpop.xlane.xlu0 %833
        %835 = vadd.xlane.f32.xlu0 %v789
        %v836 = vpop.xlane.xlu0 %835
        %837 = vadd.xlane.f32.xlu0 %v792
        %v838 = vpop.xlane.xlu0 %837
        %839 = vadd.xlane.f32.xlu0 %v797
        %v840 = vpop.xlane.xlu0 %839
        %841 = vadd.xlane.f32.xlu0 %v800
        %v842 = vpop.xlane.xlu0 %841
        %843 = vadd.xlane.f32.xlu0 %v805
        %v844 = vpop.xlane.xlu0 %843
        %845 = vadd.xlane.f32.xlu0 %v808
        %v846 = vpop.xlane.xlu0 %845
        %847 = vadd.xlane.f32.xlu0 %v813
        %v848 = vpop.xlane.xlu0 %847
        %849 = vadd.xlane.f32.xlu0 %v816
        %v850 = vpop.xlane.xlu0 %849
        %v851 = vmul.f32 %v820, 0.03125
        %v852 = vmul.f32 %v822, 0.03125
        %v853 = vmul.f32 %v824, 0.03125
        %v854 = vmul.f32 %v826, 0.03125
        %v855 = vmul.f32 %v828, 0.03125
        %v856 = vmul.f32 %v830, 0.03125
        %v857 = vmul.f32 %v832, 0.03125
        %v858 = vmul.f32 %v834, 0.03125
        %v859 = vmul.f32 %v836, 0.03125
        %v860 = vmul.f32 %v838, 0.03125
        %v861 = vmul.f32 %v840, 0.03125
        %v862 = vmul.f32 %v842, 0.03125
        %v863 = vmul.f32 %v844, 0.03125
        %v864 = vmul.f32 %v846, 0.03125
        %v865 = vmul.f32 %v848, 0.03125
        %v866 = vmul.f32 %v850, 0.03125
        %v867 = vmul.f32 %v757, %v757
        %v868 = vmul.f32 %v760, %v760
        %v869 = vmul.f32 %v765, %v765
        %v870 = vmul.f32 %v768, %v768
        %v871 = vmul.f32 %v773, %v773
        %v872 = vmul.f32 %v776, %v776
        %v873 = vmul.f32 %v781, %v781
        %v874 = vmul.f32 %v784, %v784
        %v875 = vmul.f32 %v789, %v789
        %v876 = vmul.f32 %v792, %v792
        %v877 = vmul.f32 %v797, %v797
        %v878 = vmul.f32 %v800, %v800
        %v879 = vmul.f32 %v805, %v805
        %v880 = vmul.f32 %v808, %v808
        %v881 = vmul.f32 %v813, %v813
        %v882 = vmul.f32 %v816, %v816
        %883 = vadd.xlane.f32.xlu0 %v867
        %v884 = vpop.xlane.xlu0 %883
        %885 = vadd.xlane.f32.xlu0 %v868
        %v886 = vpop.xlane.xlu0 %885
        %887 = vadd.xlane.f32.xlu0 %v869
        %v888 = vpop.xlane.xlu0 %887
        %889 = vadd.xlane.f32.xlu0 %v870
        %v890 = vpop.xlane.xlu0 %889
        %891 = vadd.xlane.f32.xlu0 %v871
        %v892 = vpop.xlane.xlu0 %891
        %893 = vadd.xlane.f32.xlu0 %v872
        %v894 = vpop.xlane.xlu0 %893
        %895 = vadd.xlane.f32.xlu0 %v873
        %v896 = vpop.xlane.xlu0 %895
        %897 = vadd.xlane.f32.xlu0 %v874
        %v898 = vpop.xlane.xlu0 %897
        %899 = vadd.xlane.f32.xlu0 %v875
        %v900 = vpop.xlane.xlu0 %899
        %901 = vadd.xlane.f32.xlu0 %v876
        %v902 = vpop.xlane.xlu0 %901
        %903 = vadd.xlane.f32.xlu0 %v877
        %v904 = vpop.xlane.xlu0 %903
        %905 = vadd.xlane.f32.xlu0 %v878
        %v906 = vpop.xlane.xlu0 %905
        %907 = vadd.xlane.f32.xlu0 %v879
        %v908 = vpop.xlane.xlu0 %907
        %909 = vadd.xlane.f32.xlu0 %v880
        %v910 = vpop.xlane.xlu0 %909
        %911 = vadd.xlane.f32.xlu0 %v881
        %v912 = vpop.xlane.xlu0 %911
        %913 = vadd.xlane.f32.xlu0 %v882
        %v914 = vpop.xlane.xlu0 %913
        %v915 = vmul.f32 %v884, 0.03125
        %v916 = vmul.f32 %v886, 0.03125
        %v917 = vmul.f32 %v888, 0.03125
        %v918 = vmul.f32 %v890, 0.03125
        %v919 = vmul.f32 %v892, 0.03125
        %v920 = vmul.f32 %v894, 0.03125
        %v921 = vmul.f32 %v896, 0.03125
        %v922 = vmul.f32 %v898, 0.03125
        %v923 = vmul.f32 %v900, 0.03125
        %v924 = vmul.f32 %v902, 0.03125
        %v925 = vmul.f32 %v904, 0.03125
        %v926 = vmul.f32 %v906, 0.03125
        %v927 = vmul.f32 %v908, 0.03125
        %v928 = vmul.f32 %v910, 0.03125
        %v929 = vmul.f32 %v912, 0.03125
        %v930 = vmul.f32 %v914, 0.03125
        %v931 = vmul.f32 %v851, %v851
        %v932 = vmul.f32 %v852, %v852
        %v933 = vmul.f32 %v853, %v853
        %v934 = vmul.f32 %v854, %v854
        %v935 = vmul.f32 %v855, %v855
        %v936 = vmul.f32 %v856, %v856
        %v937 = vmul.f32 %v857, %v857
        %v938 = vmul.f32 %v858, %v858
        %v939 = vmul.f32 %v859, %v859
        %v940 = vmul.f32 %v860, %v860
        %v941 = vmul.f32 %v861, %v861
        %v942 = vmul.f32 %v862, %v862
        %v943 = vmul.f32 %v863, %v863
        %v944 = vmul.f32 %v864, %v864
        %v945 = vmul.f32 %v865, %v865
        %v946 = vmul.f32 %v866, %v866
        %v947 = vsub.f32 %v915, %v931
        %v948 = vsub.f32 %v916, %v932
        %v949 = vsub.f32 %v917, %v933
        %v950 = vsub.f32 %v918, %v934
        %v951 = vsub.f32 %v919, %v935
        %v952 = vsub.f32 %v920, %v936
        %v953 = vsub.f32 %v921, %v937
        %v954 = vsub.f32 %v922, %v938
        %v955 = vsub.f32 %v923, %v939
        %v956 = vsub.f32 %v924, %v940
        %v957 = vsub.f32 %v925, %v941
        %v958 = vsub.f32 %v926, %v942
        %v959 = vsub.f32 %v927, %v943
        %v960 = vsub.f32 %v928, %v944
        %v961 = vsub.f32 %v929, %v945
        %v962 = vsub.f32 %v930, %v946
        %v963 = vsub.f32 %v757, %v851
        %v964 = vsub.f32 %v760, %v852
        %v965 = vsub.f32 %v765, %v853
        %v966 = vsub.f32 %v768, %v854
        %v967 = vsub.f32 %v773, %v855
        %v968 = vsub.f32 %v776, %v856
        %v969 = vsub.f32 %v781, %v857
        %v970 = vsub.f32 %v784, %v858
        %v971 = vsub.f32 %v789, %v859
        %v972 = vsub.f32 %v792, %v860
        %v973 = vsub.f32 %v797, %v861
        %v974 = vsub.f32 %v800, %v862
        %v975 = vsub.f32 %v805, %v863
        %v976 = vsub.f32 %v808, %v864
        %v977 = vsub.f32 %v813, %v865
        %v978 = vsub.f32 %v816, %v866
        %v979 = vadd.f32 %v947, 1e-05
        %v980 = vadd.f32 %v948, 1e-05
        %v981 = vadd.f32 %v949, 1e-05
        %v982 = vadd.f32 %v950, 1e-05
        %v983 = vadd.f32 %v951, 1e-05
        %v984 = vadd.f32 %v952, 1e-05
        %v985 = vadd.f32 %v953, 1e-05
        %v986 = vadd.f32 %v954, 1e-05
        %v987 = vadd.f32 %v955, 1e-05
        %v988 = vadd.f32 %v956, 1e-05
        %v989 = vadd.f32 %v957, 1e-05
        %v990 = vadd.f32 %v958, 1e-05
        %v991 = vadd.f32 %v959, 1e-05
        %v992 = vadd.f32 %v960, 1e-05
        %v993 = vadd.f32 %v961, 1e-05
        %v994 = vadd.f32 %v962, 1e-05
        %v995 = vrsqrt.pop %v979
        %v996 = vrsqrt.pop %v980
        %v997 = vrsqrt.pop %v981
        %v998 = vrsqrt.pop %v982
        %v999 = vrsqrt.pop %v983
        %v1000 = vrsqrt.pop %v984
        %v1001 = vrsqrt.pop %v985
        %v1002 = vrsqrt.pop %v986
        %v1003 = vrsqrt.pop %v987
        %v1004 = vrsqrt.pop %v988
        %v1005 = vrsqrt.pop %v989
        %v1006 = vrsqrt.pop %v990
        %v1007 = vrsqrt.pop %v991
        %v1008 = vrsqrt.pop %v992
        %v1009 = vrsqrt.pop %v993
        %v1010 = vrsqrt.pop %v994
        %v1011 = vmul.f32 %v963, %v995
        %v1012 = vmul.f32 %v964, %v996
        %v1013 = vmul.f32 %v965, %v997
        %v1014 = vmul.f32 %v966, %v998
        %v1015 = vmul.f32 %v967, %v999
        %v1016 = vmul.f32 %v968, %v1000
        %v1017 = vmul.f32 %v969, %v1001
        %v1018 = vmul.f32 %v970, %v1002
        %v1019 = vmul.f32 %v971, %v1003
        %v1020 = vmul.f32 %v972, %v1004
        %v1021 = vmul.f32 %v973, %v1005
        %v1022 = vmul.f32 %v974, %v1006
        %v1023 = vmul.f32 %v975, %v1007
        %v1024 = vmul.f32 %v976, %v1008
        %v1025 = vmul.f32 %v977, %v1009
        %v1026 = vmul.f32 %v978, %v1010
        %v1027 = vlaneseq
        %v1028 = vshrl.u32 %v1027, 7
        %v1029 = vsub.s32 0, %v1028
        %v1030 = vrot.slane %v233, %v1029
        %v1031 = vmul.f32 %v1011, %v1030
        %v1032 = vmul.f32 %v1012, %v1030
        %v1033 = vmul.f32 %v1013, %v1030
        %v1034 = vmul.f32 %v1014, %v1030
        %v1035 = vmul.f32 %v1015, %v1030
        %v1036 = vmul.f32 %v1016, %v1030
        %v1037 = vmul.f32 %v1017, %v1030
        %v1038 = vmul.f32 %v1018, %v1030
        %v1039 = vmul.f32 %v1019, %v1030
        %v1040 = vmul.f32 %v1020, %v1030
        %v1041 = vmul.f32 %v1021, %v1030
        %v1042 = vmul.f32 %v1022, %v1030
        %v1043 = vmul.f32 %v1023, %v1030
        %v1044 = vmul.f32 %v1024, %v1030
        %v1045 = vmul.f32 %v1025, %v1030
        %v1046 = vmul.f32 %v1026, %v1030
        %v1047 = vlaneseq
        %v1048 = vshrl.u32 %v1047, 7
        %v1049 = vsub.s32 0, %v1048
        %v1050 = vrot.slane %v234, %v1049
        %v1051 = vadd.f32 %v1031, %v1050
        %v1052 = vadd.f32 %v1032, %v1050
        %v1053 = vadd.f32 %v1033, %v1050
        %v1054 = vadd.f32 %v1034, %v1050
        %v1055 = vadd.f32 %v1035, %v1050
        %v1056 = vadd.f32 %v1036, %v1050
        %v1057 = vadd.f32 %v1037, %v1050
        %v1058 = vadd.f32 %v1038, %v1050
        %v1059 = vadd.f32 %v1039, %v1050
        %v1060 = vadd.f32 %v1040, %v1050
        %v1061 = vadd.f32 %v1041, %v1050
        %v1062 = vadd.f32 %v1042, %v1050
        %v1063 = vadd.f32 %v1043, %v1050
        %v1064 = vadd.f32 %v1044, %v1050
        %v1065 = vadd.f32 %v1045, %v1050
        %v1066 = vadd.f32 %v1046, %v1050
        %v1067 = vmax.f32 %v1051, 0.0
        %v1068 = vmax.f32 %v1052, 0.0
        %v1069 = vmax.f32 %v1053, 0.0
        %v1070 = vmax.f32 %v1054, 0.0
        %v1071 = vmax.f32 %v1055, 0.0
        %v1072 = vmax.f32 %v1056, 0.0
        %v1073 = vmax.f32 %v1057, 0.0
        %v1074 = vmax.f32 %v1058, 0.0
        %v1075 = vmax.f32 %v1059, 0.0
        %v1076 = vmax.f32 %v1060, 0.0
        %v1077 = vmax.f32 %v1061, 0.0
        %v1078 = vmax.f32 %v1062, 0.0
        %v1079 = vmax.f32 %v1063, 0.0
        %v1080 = vmax.f32 %v1064, 0.0
        %v1081 = vmax.f32 %v1065, 0.0
        %v1082 = vmax.f32 %v1066, 0.0
        %v1083 = vpack.c.bf16 %v1068, %v1067
        %v1084 = vpack.c.bf16 %v1070, %v1069
        %v1085 = vpack.c.bf16 %v1072, %v1071
        %v1086 = vpack.c.bf16 %v1074, %v1073
        %v1087 = vpack.c.bf16 %v1076, %v1075
        %v1088 = vpack.c.bf16 %v1078, %v1077
        %v1089 = vpack.c.bf16 %v1080, %v1079
        %v1090 = vpack.c.bf16 %v1082, %v1081
        %v1091 = vlaneseq
        %v1092 = vshrl.u32 %v1091, 7
        %v1093 = vsub.s32 0, %v1092
        %v1094 = vrot.slane %v235, %v1093
        %v1111 = vunpack.c.l.b16 %v213
        %v1112 = vunpack.c.l.b16 %v214
        %v1113 = vunpack.c.l.b16 %v215
        %v1114 = vunpack.c.l.b16 %v216
        %v1115 = vunpack.c.l.b16 %v217
        %v1116 = vunpack.c.l.b16 %v218
        %v1117 = vunpack.c.l.b16 %v219
        %v1118 = vunpack.c.l.b16 %v220
        %v1119 = vunpack.c.l.b16 %v221
        %v1120 = vunpack.c.l.b16 %v222
        %v1121 = vunpack.c.l.b16 %v223
        %v1122 = vunpack.c.l.b16 %v224
        %v1123 = vunpack.c.l.b16 %v225
        %v1124 = vunpack.c.l.b16 %v226
        %v1125 = vunpack.c.l.b16 %v227
        %v1126 = vunpack.c.l.b16 %v228
        %v1127 = vpack.c.b16 %v1112, %v1111
        %v1128 = vpack.c.b16 %v1114, %v1113
        %v1129 = vpack.c.b16 %v1116, %v1115
        %v1130 = vpack.c.b16 %v1118, %v1117
        %v1131 = vpack.c.b16 %v1120, %v1119
        %v1132 = vpack.c.b16 %v1122, %v1121
        %v1133 = vpack.c.b16 %v1124, %v1123
        %v1134 = vpack.c.b16 %v1126, %v1125
        %1143 = vmatprep.subr.bf16.mxu0 0
        %1144 = vmatpush1.bf16.msra.mxu0 %v1127
        %1145 = vmatprep.subr.bf16.mxu0 0
        %1146 = vmatpush1.bf16.msra.mxu0 %v1128
        %1147 = vmatprep.subr.bf16.mxu0 0
        %1148 = vmatpush1.bf16.msra.mxu0 %v1129
        %1149 = vmatprep.subr.bf16.mxu0 0
        %1150 = vmatpush1.bf16.msra.mxu0 %v1130
        %1151 = vmatprep.subr.bf16.mxu0 0
        %1152 = vmatpush1.bf16.msra.mxu0 %v1131
        %1153 = vmatprep.subr.bf16.mxu0 0
        %1154 = vmatpush1.bf16.msra.mxu0 %v1132
        %1155 = vmatprep.subr.bf16.mxu0 0
        %1156 = vmatpush1.bf16.msra.mxu0 %v1133
        %1157 = vmatprep.subr.bf16.mxu0 0
        %1158 = vmatpush1.bf16.msra.mxu0 %v1134
        %1159 = vmatprep.subr.bf16.mxu0 0
        %1160 = vmatpush1.bf16.msra.mxu0 0
        %1161 = vmatprep.subr.bf16.mxu0 0
        %1162 = vmatpush1.bf16.msra.mxu0 0
        %1163 = vmatprep.subr.bf16.mxu0 0
        %1164 = vmatpush1.bf16.msra.mxu0 0
        %1165 = vmatprep.subr.bf16.mxu0 0
        %1166 = vmatpush1.bf16.msra.mxu0 0
        %1167 = vmatprep.subr.bf16.mxu0 0
        %1168 = vmatpush1.bf16.msra.mxu0 0
        %1169 = vmatprep.subr.bf16.mxu0 0
        %1170 = vmatpush1.bf16.msra.mxu0 0
        %1171 = vmatprep.subr.bf16.mxu0 0
        %1172 = vmatpush1.bf16.msra.mxu0 0
        %1173 = vmatprep.subr.bf16.mxu0 0
        %1174 = vmatpush1.bf16.msra.mxu0 0
        %1175 = vmatprep.mubr.bf16.mxu0 0
        %1176 = vmatmul.mubr.bf16.gmra.mrb[0].mxu0 %v1083
        %v1177 = vpop.f32.mrb[0].mxu0
        %v1178 = vadd.f32 %v1094, %v1177
        %v1179 = vpop.f32.mrb[0].mxu0
        %v1180 = vpop.f32.mrb[0].mxu0
        %v1181 = vadd.f32 %v1094, %v1180
        %v1182 = vpop.f32.mrb[0].mxu0
        %1183 = vmatprep.mubr.bf16.mxu0 0
        %1184 = vmatmul.mubr.bf16.gmra.mrb[0].mxu0 %v1084
        %v1185 = vpop.f32.mrb[0].mxu0
        %v1186 = vadd.f32 %v1094, %v1185
        %v1187 = vpop.f32.mrb[0].mxu0
        %v1188 = vpop.f32.mrb[0].mxu0
        %v1189 = vadd.f32 %v1094, %v1188
        %v1190 = vpop.f32.mrb[0].mxu0
        %1191 = vmatprep.mubr.bf16.mxu0 0
        %1192 = vmatmul.mubr.bf16.gmra.mrb[0].mxu0 %v1085
        %v1193 = vpop.f32.mrb[0].mxu0
        %v1194 = vadd.f32 %v1094, %v1193
        %v1195 = vpop.f32.mrb[0].mxu0
        %v1196 = vpop.f32.mrb[0].mxu0
        %v1197 = vadd.f32 %v1094, %v1196
        %v1198 = vpop.f32.mrb[0].mxu0
        %1199 = vmatprep.mubr.bf16.mxu0 0
        %1200 = vmatmul.mubr.bf16.gmra.mrb[0].mxu0 %v1086
        %v1201 = vpop.f32.mrb[0].mxu0
        %v1202 = vadd.f32 %v1094, %v1201
        %v1203 = vpop.f32.mrb[0].mxu0
        %v1204 = vpop.f32.mrb[0].mxu0
        %v1205 = vadd.f32 %v1094, %v1204
        %v1206 = vpop.f32.mrb[0].mxu0
        %1207 = vmatprep.mubr.bf16.mxu0 0
        %1208 = vmatmul.mubr.bf16.gmra.mrb[0].mxu0 %v1087
        %v1209 = vpop.f32.mrb[0].mxu0
        %v1210 = vadd.f32 %v1094, %v1209
        %v1211 = vpop.f32.mrb[0].mxu0
        %v1212 = vpop.f32.mrb[0].mxu0
        %v1213 = vadd.f32 %v1094, %v1212
        %v1214 = vpop.f32.mrb[0].mxu0
        %1215 = vmatprep.mubr.bf16.mxu0 0
        %1216 = vmatmul.mubr.bf16.gmra.mrb[0].mxu0 %v1088
        %v1217 = vpop.f32.mrb[0].mxu0
        %v1218 = vadd.f32 %v1094, %v1217
        %v1219 = vpop.f32.mrb[0].mxu0
        %v1220 = vpop.f32.mrb[0].mxu0
        %v1221 = vadd.f32 %v1094, %v1220
        %v1222 = vpop.f32.mrb[0].mxu0
        %1223 = vmatprep.mubr.bf16.mxu0 0
        %1224 = vmatmul.mubr.bf16.gmra.mrb[0].mxu0 %v1089
        %v1225 = vpop.f32.mrb[0].mxu0
        %v1226 = vadd.f32 %v1094, %v1225
        %v1227 = vpop.f32.mrb[0].mxu0
        %v1228 = vpop.f32.mrb[0].mxu0
        %v1229 = vadd.f32 %v1094, %v1228
        %v1230 = vpop.f32.mrb[0].mxu0
        %1231 = vmatprep.mubr.bf16.mxu0 0
        %1232 = vmatmul.mubr.bf16.gmra.mrb[0].mxu0 %v1090
        %v1233 = vpop.f32.mrb[0].mxu0
        %v1234 = vadd.f32 %v1094, %v1233
        %v1235 = vpop.f32.mrb[0].mxu0
        %v1236 = vpop.f32.mrb[0].mxu0
        %v1237 = vadd.f32 %v1094, %v1236
        %v1238 = vpop.f32.mrb[0].mxu0
        %1239 = vdwg.mxu0
        %v1240 = vxor.u32 %v1178, 2147483648
        %v1241 = vxor.u32 %v1181, 2147483648
        %v1242 = vxor.u32 %v1186, 2147483648
        %v1243 = vxor.u32 %v1189, 2147483648
        %v1244 = vxor.u32 %v1194, 2147483648
        %v1245 = vxor.u32 %v1197, 2147483648
        %v1246 = vxor.u32 %v1202, 2147483648
        %v1247 = vxor.u32 %v1205, 2147483648
        %v1248 = vxor.u32 %v1210, 2147483648
        %v1249 = vxor.u32 %v1213, 2147483648
        %v1250 = vxor.u32 %v1218, 2147483648
        %v1251 = vxor.u32 %v1221, 2147483648
        %v1252 = vxor.u32 %v1226, 2147483648
        %v1253 = vxor.u32 %v1229, 2147483648
        %v1254 = vxor.u32 %v1234, 2147483648
        %v1255 = vxor.u32 %v1237, 2147483648
        %v1256 = vmul.f32 %v1240, 1.442695
        %v1257 = vpow.pop %v1256
        %v1258 = vmul.f32 %v1241, 1.442695
        %v1259 = vpow.pop %v1258
        %v1260 = vmul.f32 %v1242, 1.442695
        %v1261 = vpow.pop %v1260
        %v1262 = vmul.f32 %v1243, 1.442695
        %v1263 = vpow.pop %v1262
        %v1264 = vmul.f32 %v1244, 1.442695
        %v1265 = vpow.pop %v1264
        %v1266 = vmul.f32 %v1245, 1.442695
        %v1267 = vpow.pop %v1266
        %v1268 = vmul.f32 %v1246, 1.442695
        %v1269 = vpow.pop %v1268
        %v1270 = vmul.f32 %v1247, 1.442695
        %v1271 = vpow.pop %v1270
        %v1272 = vmul.f32 %v1248, 1.442695
        %v1273 = vpow.pop %v1272
        %v1274 = vmul.f32 %v1249, 1.442695
        %v1275 = vpow.pop %v1274
        %v1276 = vmul.f32 %v1250, 1.442695
        %v1277 = vpow.pop %v1276
        %v1278 = vmul.f32 %v1251, 1.442695
        %v1279 = vpow.pop %v1278
        %v1280 = vmul.f32 %v1252, 1.442695
        %v1281 = vpow.pop %v1280
        %v1282 = vmul.f32 %v1253, 1.442695
        %v1283 = vpow.pop %v1282
        %v1284 = vmul.f32 %v1254, 1.442695
        %v1285 = vpow.pop %v1284
        %v1286 = vmul.f32 %v1255, 1.442695
        %v1287 = vpow.pop %v1286
        %v1288 = vadd.f32 %v1257, 1.0
        %v1289 = vadd.f32 %v1259, 1.0
        %v1290 = vadd.f32 %v1261, 1.0
        %v1291 = vadd.f32 %v1263, 1.0
        %v1292 = vadd.f32 %v1265, 1.0
        %v1293 = vadd.f32 %v1267, 1.0
        %v1294 = vadd.f32 %v1269, 1.0
        %v1295 = vadd.f32 %v1271, 1.0
        %v1296 = vadd.f32 %v1273, 1.0
        %v1297 = vadd.f32 %v1275, 1.0
        %v1298 = vadd.f32 %v1277, 1.0
        %v1299 = vadd.f32 %v1279, 1.0
        %v1300 = vadd.f32 %v1281, 1.0
        %v1301 = vadd.f32 %v1283, 1.0
        %v1302 = vadd.f32 %v1285, 1.0
        %v1303 = vadd.f32 %v1287, 1.0
        %v1304 = vrcp.pop %v1288
        %v1305 = vmul.f32 1.0, %v1304
        %v1306 = vrcp.pop %v1289
        %v1307 = vmul.f32 1.0, %v1306
        %v1308 = vrcp.pop %v1290
        %v1309 = vmul.f32 1.0, %v1308
        %v1310 = vrcp.pop %v1291
        %v1311 = vmul.f32 1.0, %v1310
        %v1312 = vrcp.pop %v1292
        %v1313 = vmul.f32 1.0, %v1312
        %v1314 = vrcp.pop %v1293
        %v1315 = vmul.f32 1.0, %v1314
        %v1316 = vrcp.pop %v1294
        %v1317 = vmul.f32 1.0, %v1316
        %v1318 = vrcp.pop %v1295
        %v1319 = vmul.f32 1.0, %v1318
        %v1320 = vrcp.pop %v1296
        %v1321 = vmul.f32 1.0, %v1320
        %v1322 = vrcp.pop %v1297
        %v1323 = vmul.f32 1.0, %v1322
        %v1324 = vrcp.pop %v1298
        %v1325 = vmul.f32 1.0, %v1324
        %v1326 = vrcp.pop %v1299
        %v1327 = vmul.f32 1.0, %v1326
        %v1328 = vrcp.pop %v1300
        %v1329 = vmul.f32 1.0, %v1328
        %v1330 = vrcp.pop %v1301
        %v1331 = vmul.f32 1.0, %v1330
        %v1332 = vrcp.pop %v1302
        %v1333 = vmul.f32 1.0, %v1332
        %v1334 = vrcp.pop %v1303
        %v1335 = vmul.f32 1.0, %v1334
        %vm1336 = vcmask 130048
        %1337 = vst.msk [vmem:[%s172] sm:$0xff] %vm1336, %v1305
        %1338 = vst.msk [vmem:[%s172 + $0x8] sm:$0xff] %vm1336, %v1307
        %1339 = vst.msk [vmem:[%s172 + $0x10] sm:$0xff] %vm1336, %v1309
        %1340 = vst.msk [vmem:[%s172 + $0x18] sm:$0xff] %vm1336, %v1311
        %1341 = vst.msk [vmem:[%s172 + $0x20] sm:$0xff] %vm1336, %v1313
        %1342 = vst.msk [vmem:[%s172 + $0x28] sm:$0xff] %vm1336, %v1315
        %1343 = vst.msk [vmem:[%s172 + $0x30] sm:$0xff] %vm1336, %v1317
        %1344 = vst.msk [vmem:[%s172 + $0x38] sm:$0xff] %vm1336, %v1319
        %1345 = vst.msk [vmem:[%s172 + $0x40] sm:$0xff] %vm1336, %v1321
        %1346 = vst.msk [vmem:[%s172 + $0x48] sm:$0xff] %vm1336, %v1323
        %1347 = vst.msk [vmem:[%s172 + $0x50] sm:$0xff] %vm1336, %v1325
        %1348 = vst.msk [vmem:[%s172 + $0x58] sm:$0xff] %vm1336, %v1327
        %1349 = vst.msk [vmem:[%s172 + $0x60] sm:$0xff] %vm1336, %v1329
        %1350 = vst.msk [vmem:[%s172 + $0x68] sm:$0xff] %vm1336, %v1331
        %1351 = vst.msk [vmem:[%s172 + $0x70] sm:$0xff] %vm1336, %v1333
        %1352 = vst.msk [vmem:[%s172 + $0x78] sm:$0xff] %vm1336, %v1335
        %s1353 = sand.u32 %s90, 1
        %s1354 = sand.u32 %s90, 1
        %s1355 = smul.addr %s1354, 128
        %s1356 = scalar_lea.vmem [#allocation2], %s1355
        // Predicated region
        $region33: #{tpu_custom_call.1} parent=31 // pred_check
          %p1357 = pneg %p100
        $region34: #{tpu_custom_call.1} parent=31 // pred_check_branch
          %1359 = sbr.rel (%p1357) target = $region36
        $region35: #{tpu_custom_call.1} parent=31 // pred_region
          %s1360 = smul.u32 16, %s14
          %s1361 = ssub.s32 25, %s1360
          %p1362 = scmp.lt.s32.totalorder %s1361, 16
          %s1363 = scalar_select %p1362, %s1361, 16
          %s1364 = smul.u32 128, %s1363
          %p1365 = scmp.ne.s32.totalorder 0, %s1364
          %s1366 = smul.addr %s1360, 8
          %s1367 = scalar_lea.vmem %s3, %s1366
          // Predicated region
          $region37: #{tpu_custom_call.1} parent=35 // pred_check
            %p1368 = pneg %p1365
          $region38: #{tpu_custom_call.1} parent=35 // pred_check_branch
            %1370 = sbr.rel (%p1368) target = $region40
          $region39: #{tpu_custom_call.1} parent=35 // pred_region
            // Predicated region
            $region41: #{tpu_custom_call.1} parent=39 // pred_check
              _
            $region42: #{tpu_custom_call.1} parent=39 // pred_check_branch
              %1372 = sbr.rel (0) target = $region44
            $region43: #{tpu_custom_call.1} parent=39 // pred_region
              // Predicated region
              $region63: #{tpu_custom_call.1} parent=43 // pred_check
                _
              $region64: #{tpu_custom_call.1} parent=43 // pred_check_branch
                %1451 = sbr.rel (0) target = $region66
              $region65: #{tpu_custom_call.1} parent=43 // pred_region
                %s1452 = sshrl.u32 %s1363, 4
                // While loop
                $region67: #{tpu_custom_call.1} parent=65 // loop_pre_header
                  _
                $region68: #{tpu_custom_call.1} parent=65 // loop_header
                  %s1454 = sphi 0, %s1456
                  %p1455 = scmp.ge.s32.totalorder %s1454, %s1452
                  %s1459 = sphi 0, %s1496
                  %s1460 = sphi %s1356, %s1499
                  %s1461 = sphi %s1367, %s1500
                $region69: #{tpu_custom_call.1} parent=65 // loop_header_branch
                  %1458 = sbr.rel (%p1455) target = $region73
                $region70: #{tpu_custom_call.1} parent=65 // loop_body
                  %v1462 = vld [vmem:[%s1460] sm:$0xff]
                  %1463 = vst [vmem:[%s1461] sm:$0xff] %v1462
                  %v1464 = vld [vmem:[%s1460 + $0x8] sm:$0xff]
                  %1465 = vst [vmem:[%s1461 + $0x8] sm:$0xff] %v1464
                  %v1466 = vld [vmem:[%s1460 + $0x10] sm:$0xff]
                  %1467 = vst [vmem:[%s1461 + $0x10] sm:$0xff] %v1466
                  %v1468 = vld [vmem:[%s1460 + $0x18] sm:$0xff]
                  %1469 = vst [vmem:[%s1461 + $0x18] sm:$0xff] %v1468
                  %v1470 = vld [vmem:[%s1460 + $0x20] sm:$0xff]
                  %1471 = vst [vmem:[%s1461 + $0x20] sm:$0xff] %v1470
                  %v1472 = vld [vmem:[%s1460 + $0x28] sm:$0xff]
                  %1473 = vst [vmem:[%s1461 + $0x28] sm:$0xff] %v1472
                  %v1474 = vld [vmem:[%s1460 + $0x30] sm:$0xff]
                  %1475 = vst [vmem:[%s1461 + $0x30] sm:$0xff] %v1474
                  %v1476 = vld [vmem:[%s1460 + $0x38] sm:$0xff]
                  %1477 = vst [vmem:[%s1461 + $0x38] sm:$0xff] %v1476
                  %v1478 = vld [vmem:[%s1460 + $0x40] sm:$0xff]
                  %1479 = vst [vmem:[%s1461 + $0x40] sm:$0xff] %v1478
                  %v1480 = vld [vmem:[%s1460 + $0x48] sm:$0xff]
                  %1481 = vst [vmem:[%s1461 + $0x48] sm:$0xff] %v1480
                  %v1482 = vld [vmem:[%s1460 + $0x50] sm:$0xff]
                  %1483 = vst [vmem:[%s1461 + $0x50] sm:$0xff] %v1482
                  %v1484 = vld [vmem:[%s1460 + $0x58] sm:$0xff]
                  %1485 = vst [vmem:[%s1461 + $0x58] sm:$0xff] %v1484
                  %v1486 = vld [vmem:[%s1460 + $0x60] sm:$0xff]
                  %1487 = vst [vmem:[%s1461 + $0x60] sm:$0xff] %v1486
                  %v1488 = vld [vmem:[%s1460 + $0x68] sm:$0xff]
                  %1489 = vst [vmem:[%s1461 + $0x68] sm:$0xff] %v1488
                  %v1490 = vld [vmem:[%s1460 + $0x70] sm:$0xff]
                  %1491 = vst [vmem:[%s1461 + $0x70] sm:$0xff] %v1490
                  %v1492 = vld [vmem:[%s1460 + $0x78] sm:$0xff]
                  %1493 = vst [vmem:[%s1461 + $0x78] sm:$0xff] %v1492
                  %s1494 = sadd.s32 1, %s1459
                  %p1495 = scmp.ge.s32.totalorder %s1494, %s1452
                  %s1496 = scalar_select %p1495, 0, %s1494
                  %s1497 = smul.u32 %s1496, 128
                  %s1498 = smul.u32 %s1496, 128
                  %s1499 = scalar_lea.vmem %s1356, %s1497 [#allocation2]
                  %s1500 = scalar_lea.vmem %s1367, %s1498
                $region71: #{tpu_custom_call.1} parent=65 // loop_footer
                  %s1456 = sadd.s32 %s1454, 1
                $region72: #{tpu_custom_call.1} parent=65 // loop_footer_branch
                  %1453 = sbr.rel target = $region68
                $region73: #{tpu_custom_call.1} parent=65 // loop_exit
                  _
                %s1501 = sshrl.u32 %s1363, 4
                %s1502 = sand.u32 %s1363, 15
                %s1503 = smul.u32 %s1501, 16
                %s1504 = smul.u32 8, %s1503
                %s1505 = scalar_lea.vmem %s1356, %s1504 [#allocation2]
                %s1506 = smul.u32 8, %s1503
                %s1507 = scalar_lea.vmem %s1367, %s1506
                // While loop
                $region74: #{tpu_custom_call.1} parent=65 // loop_pre_header
                  _
                $region75: #{tpu_custom_call.1} parent=65 // loop_header
                  %s1509 = sphi 0, %s1511
                  %p1510 = scmp.ge.s32.totalorder %s1509, %s1502
                  %s1514 = sphi 0, %s1521
                  %s1515 = sphi %s1505, %s1524
                  %s1516 = sphi %s1507, %s1525
                $region76: #{tpu_custom_call.1} parent=65 // loop_header_branch
                  %1513 = sbr.rel (%p1510) target = $region80
                $region77: #{tpu_custom_call.1} parent=65 // loop_body
                  %v1517 = vld [vmem:[%s1515] sm:$0xff]
                  %1518 = vst [vmem:[%s1516] sm:$0xff] %v1517
                  %s1519 = sadd.s32 1, %s1514
                  %p1520 = scmp.ge.s32.totalorder %s1519, %s1502
                  %s1521 = scalar_select %p1520, 0, %s1519
                  %s1522 = smul.u32 %s1521, 8
                  %s1523 = smul.u32 %s1521, 8
                  %s1524 = scalar_lea.vmem %s1505, %s1522 [#allocation2]
                  %s1525 = scalar_lea.vmem %s1507, %s1523
                $region78: #{tpu_custom_call.1} parent=65 // loop_footer
                  %s1511 = sadd.s32 %s1509, 1
                $region79: #{tpu_custom_call.1} parent=65 // loop_footer_branch
                  %1508 = sbr.rel target = $region75
                $region80: #{tpu_custom_call.1} parent=65 // loop_exit
                  _
              $region66: #{tpu_custom_call.1} parent=43 // pred_fallthru
                _
              // Predicated region
              $region81: #{tpu_custom_call.1} parent=43 // pred_check
                _
              $region82: #{tpu_custom_call.1} parent=43 // pred_check_branch
                %1527 = sbr.rel target = $region84
              $region83: #{tpu_custom_call.1} parent=43 // pred_region
                _
              $region84: #{tpu_custom_call.1} parent=43 // pred_fallthru
                _
            $region44: #{tpu_custom_call.1} parent=39 // pred_fallthru
              _
            // Predicated region
            $region45: #{tpu_custom_call.1} parent=39 // pred_check
              _
            $region46: #{tpu_custom_call.1} parent=39 // pred_check_branch
              %1374 = sbr.rel target = $region48
            $region47: #{tpu_custom_call.1} parent=39 // pred_region
              %s1376 = sshrl.u32 %s1363, 4
              // While loop
              $region49: #{tpu_custom_call.1} parent=47 // loop_pre_header
                _
              $region50: #{tpu_custom_call.1} parent=47 // loop_header
                %s1378 = sphi 0, %s1380
                %p1379 = scmp.ge.s32.totalorder %s1378, %s1376
                %s1383 = sphi 0, %s1420
                %s1384 = sphi %s1356, %s1423
                %s1385 = sphi %s1367, %s1424
              $region51: #{tpu_custom_call.1} parent=47 // loop_header_branch
                %1382 = sbr.rel (%p1379) target = $region55
              $region52: #{tpu_custom_call.1} parent=47 // loop_body
                %v1386 = vld [vmem:[%s1384] sm:$0xff]
                %1387 = vst [vmem:[%s1385] sm:$0xff] %v1386
                %v1388 = vld [vmem:[%s1384 + $0x8] sm:$0xff]
                %1389 = vst [vmem:[%s1385 + $0x8] sm:$0xff] %v1388
                %v1390 = vld [vmem:[%s1384 + $0x10] sm:$0xff]
                %1391 = vst [vmem:[%s1385 + $0x10] sm:$0xff] %v1390
                %v1392 = vld [vmem:[%s1384 + $0x18] sm:$0xff]
                %1393 = vst [vmem:[%s1385 + $0x18] sm:$0xff] %v1392
                %v1394 = vld [vmem:[%s1384 + $0x20] sm:$0xff]
                %1395 = vst [vmem:[%s1385 + $0x20] sm:$0xff] %v1394
                %v1396 = vld [vmem:[%s1384 + $0x28] sm:$0xff]
                %1397 = vst [vmem:[%s1385 + $0x28] sm:$0xff] %v1396
                %v1398 = vld [vmem:[%s1384 + $0x30] sm:$0xff]
                %1399 = vst [vmem:[%s1385 + $0x30] sm:$0xff] %v1398
                %v1400 = vld [vmem:[%s1384 + $0x38] sm:$0xff]
                %1401 = vst [vmem:[%s1385 + $0x38] sm:$0xff] %v1400
                %v1402 = vld [vmem:[%s1384 + $0x40] sm:$0xff]
                %1403 = vst [vmem:[%s1385 + $0x40] sm:$0xff] %v1402
                %v1404 = vld [vmem:[%s1384 + $0x48] sm:$0xff]
                %1405 = vst [vmem:[%s1385 + $0x48] sm:$0xff] %v1404
                %v1406 = vld [vmem:[%s1384 + $0x50] sm:$0xff]
                %1407 = vst [vmem:[%s1385 + $0x50] sm:$0xff] %v1406
                %v1408 = vld [vmem:[%s1384 + $0x58] sm:$0xff]
                %1409 = vst [vmem:[%s1385 + $0x58] sm:$0xff] %v1408
                %v1410 = vld [vmem:[%s1384 + $0x60] sm:$0xff]
                %1411 = vst [vmem:[%s1385 + $0x60] sm:$0xff] %v1410
                %v1412 = vld [vmem:[%s1384 + $0x68] sm:$0xff]
                %1413 = vst [vmem:[%s1385 + $0x68] sm:$0xff] %v1412
                %v1414 = vld [vmem:[%s1384 + $0x70] sm:$0xff]
                %1415 = vst [vmem:[%s1385 + $0x70] sm:$0xff] %v1414
                %v1416 = vld [vmem:[%s1384 + $0x78] sm:$0xff]
                %1417 = vst [vmem:[%s1385 + $0x78] sm:$0xff] %v1416
                %s1418 = sadd.s32 1, %s1383
                %p1419 = scmp.ge.s32.totalorder %s1418, %s1376
                %s1420 = scalar_select %p1419, 0, %s1418
                %s1421 = smul.u32 %s1420, 128
                %s1422 = smul.u32 %s1420, 128
                %s1423 = scalar_lea.vmem %s1356, %s1421 [#allocation2]
                %s1424 = scalar_lea.vmem %s1367, %s1422
              $region53: #{tpu_custom_call.1} parent=47 // loop_footer
                %s1380 = sadd.s32 %s1378, 1
              $region54: #{tpu_custom_call.1} parent=47 // loop_footer_branch
                %1377 = sbr.rel target = $region50
              $region55: #{tpu_custom_call.1} parent=47 // loop_exit
                _
              %s1425 = sshrl.u32 %s1363, 4
              %s1426 = sand.u32 %s1363, 15
              %s1427 = smul.u32 %s1425, 16
              %s1428 = smul.u32 8, %s1427
              %s1429 = scalar_lea.vmem %s1356, %s1428 [#allocation2]
              %s1430 = smul.u32 8, %s1427
              %s1431 = scalar_lea.vmem %s1367, %s1430
              // While loop
              $region56: #{tpu_custom_call.1} parent=47 // loop_pre_header
                _
              $region57: #{tpu_custom_call.1} parent=47 // loop_header
                %s1433 = sphi 0, %s1435
                %p1434 = scmp.ge.s32.totalorder %s1433, %s1426
                %s1438 = sphi 0, %s1445
                %s1439 = sphi %s1429, %s1448
                %s1440 = sphi %s1431, %s1449
              $region58: #{tpu_custom_call.1} parent=47 // loop_header_branch
                %1437 = sbr.rel (%p1434) target = $region62
              $region59: #{tpu_custom_call.1} parent=47 // loop_body
                %v1441 = vld [vmem:[%s1439] sm:$0xff]
                %1442 = vst [vmem:[%s1440] sm:$0xff] %v1441
                %s1443 = sadd.s32 1, %s1438
                %p1444 = scmp.ge.s32.totalorder %s1443, %s1426
                %s1445 = scalar_select %p1444, 0, %s1443
                %s1446 = smul.u32 %s1445, 8
                %s1447 = smul.u32 %s1445, 8
                %s1448 = scalar_lea.vmem %s1429, %s1446 [#allocation2]
                %s1449 = scalar_lea.vmem %s1431, %s1447
              $region60: #{tpu_custom_call.1} parent=47 // loop_footer
                %s1435 = sadd.s32 %s1433, 1
              $region61: #{tpu_custom_call.1} parent=47 // loop_footer_branch
                %1432 = sbr.rel target = $region57
              $region62: #{tpu_custom_call.1} parent=47 // loop_exit
                _
            $region48: #{tpu_custom_call.1} parent=39 // pred_fallthru
              _
          $region40: #{tpu_custom_call.1} parent=35 // pred_fallthru
            _
          %1528 = vnop
        $region36: #{tpu_custom_call.1} parent=31 // pred_fallthru
          _
      $region32: #{tpu_custom_call.1} parent=5 // pred_fallthru
        _
      %p1529 = scmp.le.s32.totalorder 2, %s9
      // Predicated region
      $region85: #{tpu_custom_call.1} parent=5 // pred_check
        %p1530 = pneg %p1529
      $region86: #{tpu_custom_call.1} parent=5 // pred_check_branch
        %1532 = sbr.rel (%p1530) target = $region88
      $region87: #{tpu_custom_call.1} parent=5 // pred_region
        %s1533 = ssub.s32 %s9, 2
        // Predicated region
        $region89: #{tpu_custom_call.1} parent=87 // pred_check
          %p1534 = pneg %p106
        $region90: #{tpu_custom_call.1} parent=87 // pred_check_branch
          %1536 = sbr.rel (%p1534) target = $region92
        $region91: #{tpu_custom_call.1} parent=87 // pred_region
          %s1537 = sand.u32 %s91, 1
          %s1538 = sand.u32 %s91, 1
          %s1539 = smul.addr %s1538, 128
          %s1540 = scalar_lea.vmem [#allocation2], %s1539
        $region92: #{tpu_custom_call.1} parent=87 // pred_fallthru
          _
      $region88: #{tpu_custom_call.1} parent=5 // pred_fallthru
        _
    $region6: #{tpu_custom_call.1} parent=1 // loop_footer
      %s13 = sadd.s32 1, %s9
    $region7: #{tpu_custom_call.1} parent=1 // loop_footer_branch
      %8 = sbr.rel target = $region3
    $region8: #{tpu_custom_call.1} parent=1 // loop_exit
      _

</llo_original>
